<compile_context>
chip_gen: v7x
topology: tpu7x:2x2x1
jax: 0.10.0
libtpu: 0.0.40
codegen_flags: <defaults>
</compile_context>

<pallas_src>
import jax
import jax.numpy as jnp
import numpy as np
from jax.experimental import pallas as pl
from jax.experimental.pallas import tpu as pltpu

EPS = 1e-12                     # torch F.normalize default eps
D_IN = 784                      # kept unpadded: full-extent lane dim on the x block
D_HID, D_HID_PAD = 400, 512     # 4 * 128
N_CLASSES, D_OUT_PAD = 10, 128


def _round_up(n, m):
    return (n + m - 1) // m * m


# --------------------------------------------------------------------------------------
# Kernels
# --------------------------------------------------------------------------------------
def _forward_body(x_ref, w1_ref, b1_ref, w2_ref, b2_ref, w3_ref, b3_ref, w4n_ref):
    """Shared compute: returns (feature f32, logits f32) for the current batch tile."""
    xb = x_ref[...].astype(jnp.bfloat16)                       # in-kernel cast (no wrapper copy)

    # input_layer: Linear(784->400) + ReLU         (bf16 operands, f32 MXU accumulation)
    h1 = jnp.dot(xb, w1_ref[...], preferred_element_type=jnp.float32) + b1_ref[...]
    h1 = jnp.maximum(h1, 0.0).astype(jnp.bfloat16)

    # hidden1: Linear(400->400) + ReLU
    h2 = jnp.dot(h1, w2_ref[...], preferred_element_type=jnp.float32) + b2_ref[...]
    h2 = jnp.maximum(h2, 0.0).astype(jnp.bfloat16)

    # layer: Linear(400->embed) -> "feature" (pre-ReLU)
    feature = jnp.dot(h2, w3_ref[...], preferred_element_type=jnp.float32) + b3_ref[...]

    # CosineLinear: out = sigma * normalize(relu(feature)) @ normalize(W)^T
    # (W-side normalization + sigma already folded into w4n at prep time.)
    a = jnp.maximum(feature, 0.0)
    ssq = jnp.sum(a * a, axis=-1, keepdims=True)
    inv = jax.lax.rsqrt(jnp.maximum(ssq, EPS * EPS))           # == 1 / max(||a||, EPS), exact
    a_n = (a * inv).astype(jnp.bfloat16)
    out = jnp.dot(a_n, w4n_ref[...], preferred_element_type=jnp.float32)
    return feature, out


def _kernel_logits(x_ref, w1_ref, b1_ref, w2_ref, b2_ref, w3_ref, b3_ref, w4n_ref, out_ref):
    _, out = _forward_body(x_ref, w1_ref, b1_ref, w2_ref, b2_ref, w3_ref, b3_ref, w4n_ref)
    out_ref[...] = out.astype(out_ref.dtype)


def _kernel_logits_feat(x_ref, w1_ref, b1_ref, w2_ref, b2_ref, w3_ref, b3_ref, w4n_ref,
                        out_ref, feat_ref):
    feature, out = _forward_body(x_ref, w1_ref, b1_ref, w2_ref, b2_ref, w3_ref, b3_ref, w4n_ref)
    feat_ref[...] = feature
    out_ref[...] = out.astype(out_ref.dtype)


# --------------------------------------------------------------------------------------
# Parameter prep (once per checkpoint)
# --------------------------------------------------------------------------------------
def prepare_params(params):
    """Pad output/contraction dims to lane-dense multiples of 128 (the 784 input dim
    stays unpadded so x needs no wrapper-side copy), cast weights to bf16, L2-normalize
    the CosineLinear weight along the embed axis and fold sigma in. Zero padding is
    exact: padded rows/cols contribute nothing to sums or norms."""
    embed_size = params["w3"].shape[1]
    d_emb_pad = _round_up(embed_size, 128)

    def pad2(a, rows, cols):
        return jnp.zeros((rows, cols), a.dtype).at[:a.shape[0], :a.shape[1]].set(a)

    w1 = pad2(params["w1"], D_IN, D_HID_PAD).astype(jnp.bfloat16)        # (784, 512)
    b1 = pad2(params["b1"], 1, D_HID_PAD)                                # biases stay f32
    w2 = pad2(params["w2"], D_HID_PAD, D_HID_PAD).astype(jnp.bfloat16)
    b2 = pad2(params["b2"], 1, D_HID_PAD)
    w3 = pad2(params["w3"], D_HID_PAD, d_emb_pad).astype(jnp.bfloat16)
    b3 = pad2(params["b3"], 1, d_emb_pad)

    w4 = params["w4"]                                                    # (embed, 10)
    w4n = w4 / jnp.maximum(jnp.linalg.norm(w4, axis=0, keepdims=True), EPS)
    w4n = params["sigma"][0, 0] * w4n                                    # fold sigma
    w4n = pad2(w4n, d_emb_pad, D_OUT_PAD).astype(jnp.bfloat16)

    return dict(w1=w1, b1=b1, w2=w2, b2=b2, w3=w3, b3=b3, w4n=w4n,
                embed_size=embed_size, d_emb_pad=d_emb_pad)


# --------------------------------------------------------------------------------------
# Forward wrapper
# --------------------------------------------------------------------------------------
def fclass_forward(x, prepped, feat=False):
    B = x.shape[0]
    embed_size = prepped["embed_size"]
    d_emb_pad = prepped["d_emb_pad"]

    # Batch bucketing (power of two, >=16): nearby batch sizes reuse one compiled
    # kernel. Row-only zero pad; skipped entirely when B already sits on a bucket.
    Bb = max(16, 1 << (max(B, 1) - 1).bit_length())
    if Bb != B:
        x = jnp.pad(x, ((0, Bb - B), (0, 0)))

    # Tile selection: single tile for tiny batches; otherwise >= 2 grid steps so both
    # v7x TensorCores are used, with tiles up to 1024 rows to amortize step overhead.
    TM = Bb if Bb < 64 else min(1024, Bb // 2)
    grid = (Bb // TM,)

    def batch_spec(shape):
        return pl.BlockSpec(shape, lambda i: (i, 0))

    def const_spec(shape):
        return pl.BlockSpec(shape, lambda i: (0, 0))

    in_specs = [
        batch_spec((TM, D_IN)),                      # x tile (full 784 lane extent, f32)
        const_spec((D_IN, D_HID_PAD)),               # w1  (constant index_map -> resident)
        const_spec((1, D_HID_PAD)),                  # b1
        const_spec((D_HID_PAD, D_HID_PAD)),          # w2
        const_spec((1, D_HID_PAD)),                  # b2
        const_spec((D_HID_PAD, d_emb_pad)),          # w3
        const_spec((1, d_emb_pad)),                  # b3
        const_spec((d_emb_pad, D_OUT_PAD)),          # w4 (normalized, sigma folded)
    ]
    args = (x, prepped["w1"], prepped["b1"], prepped["w2"], prepped["b2"],
            prepped["w3"], prepped["b3"], prepped["w4n"])
    compiler_params = pltpu.CompilerParams(
        dimension_semantics=("parallel",),
        vmem_limit_bytes=32 * 1024 * 1024,           # headroom for TM=1024 on v5e (16 MiB default)
    )

    if feat:
        out_pad, feat_pad = pl.pallas_call(
            _kernel_logits_feat,
            grid=grid,
            out_shape=(
                jax.ShapeDtypeStruct((Bb, D_OUT_PAD), jnp.bfloat16),   # lane-dense bf16 logits
                jax.ShapeDtypeStruct((Bb, d_emb_pad), jnp.float32),    # feature kept f32
            ),
            in_specs=in_specs,
            out_specs=(
                batch_spec((TM, D_OUT_PAD)),
                batch_spec((TM, d_emb_pad)),
            ),
            compiler_params=compiler_params,
        )(*args)
        out = out_pad[:B, :N_CLASSES].astype(jnp.float32)
        feature = feat_pad[:B, :embed_size]
        return feature, out

    out_pad = pl.pallas_call(
        _kernel_logits,                              # no feature writeback at all
        grid=grid,
        out_shape=jax.ShapeDtypeStruct((Bb, D_OUT_PAD), jnp.bfloat16),
        in_specs=in_specs,
        out_specs=batch_spec((TM, D_OUT_PAD)),
        compiler_params=compiler_params,
    )(*args)
    return out_pad[:B, :N_CLASSES].astype(jnp.float32)


# --------------------------------------------------------------------------------------
# Synthetic params + references
# --------------------------------------------------------------------------------------
def init_params(key, embed_size=32):
    """Deterministic synthetic parameters (shapes match the PyTorch module;
    Linear weights stored pre-transposed as (in, out), CosineLinear as (embed, 10))."""
    ks = jax.random.split(key, 7)

    def lin(kw, kb, fan_in, fan_out):
        bound = 1.0 / np.sqrt(fan_in)
        w = jax.random.uniform(kw, (fan_in, fan_out), jnp.float32, -bound, bound)
        b = jax.random.uniform(kb, (1, fan_out), jnp.float32, -bound, bound)
        return w, b

    w1, b1 = lin(ks[0], ks[1], D_IN, D_HID)
    w2, b2 = lin(ks[2], ks[3], D_HID, D_HID)
    w3, b3 = lin(ks[4], ks[5], D_HID, embed_size)
    w4 = jax.random.normal(ks[6], (embed_size, N_CLASSES), jnp.float32) * 0.1
    sigma = jnp.ones((1, 1), jnp.float32)            # CosineLinear sigma initialized to 1
    return dict(w1=w1, b1=b1, w2=w2, b2=b2, w3=w3, b3=b3, w4=w4, sigma=sigma)


def _reference_f32(x, p):
    """Original module semantics in f32 (loose sanity check for the bf16 kernel)."""
    h1 = jnp.maximum(x @ p["w1"] + p["b1"], 0.0)
    h2 = jnp.maximum(h1 @ p["w2"] + p["b2"], 0.0)
    feature = h2 @ p["w3"] + p["b3"]
    a = jnp.maximum(feature, 0.0)
    a_n = a / jnp.maximum(jnp.linalg.norm(a, axis=-1, keepdims=True), EPS)
    w4_n = p["w4"] / jnp.maximum(jnp.linalg.norm(p["w4"], axis=0, keepdims=True), EPS)
    out = p["sigma"][0, 0] * (a_n @ w4_n)
    return feature, out


def _reference_bf16(x, prepped):
    """Mimics the kernel's numerics (bf16 operands, f32 accumulation) for a tight check."""
    bf = jnp.bfloat16
    h1 = jnp.maximum(jnp.dot(x.astype(bf), prepped["w1"], preferred_element_type=jnp.float32)
                     + prepped["b1"], 0.0)
    h2 = jnp.maximum(jnp.dot(h1.astype(bf), prepped["w2"], preferred_element_type=jnp.float32)
                     + prepped["b2"], 0.0)
    feature = (jnp.dot(h2.astype(bf), prepped["w3"], preferred_element_type=jnp.float32)
               + prepped["b3"])
    a = jnp.maximum(feature, 0.0)
    a_n = a * jax.lax.rsqrt(jnp.maximum(jnp.sum(a * a, axis=-1, keepdims=True), EPS * EPS))
    out = jnp.dot(a_n.astype(bf), prepped["w4n"], preferred_element_type=jnp.float32)
    return feature[:, :prepped["embed_size"]], out[:, :N_CLASSES]


if __name__ == "__main__":
    key = jax.random.PRNGKey(0)
    kx, kp = jax.random.split(key)

    B, EMBED = 8, 32
    x = jax.random.normal(kx, (B, D_IN), jnp.float32)
    params = init_params(kp, embed_size=EMBED)
    prepped = prepare_params(params)

    feature, out = fclass_forward(x, prepped, feat=True)
    out = jax.block_until_ready(out)
    feature = jax.block_until_ready(feature)
    assert out.shape == (B, N_CLASSES) and feature.shape == (B, EMBED)

    # Tight check against a reference with the same bf16/f32 numerics as the kernel
    # (logits are bf16-stored, so allow one bf16 ulp of slack).
    feat_bf, out_bf = _reference_bf16(x, prepped)
    assert np.allclose(np.asarray(feature), np.asarray(feat_bf), atol=2e-3, rtol=2e-3)
    assert np.allclose(np.asarray(out), np.asarray(out_bf), atol=1e-2, rtol=1e-2)

    # Loose sanity check against the f32 module semantics.
    feat_f32, out_f32 = _reference_f32(x, params)
    assert np.allclose(np.asarray(feature), np.asarray(feat_f32), atol=1e-1, rtol=1e-1)
    assert np.allclose(np.asarray(out), np.asarray(out_f32), atol=1e-1, rtol=1e-1)

    # feat=False path (separate no-feature-writeback kernel) returns the same logits.
    out2 = jax.block_until_ready(fclass_forward(x, prepped, feat=False))
    assert out2.shape == (B, N_CLASSES)
    assert np.allclose(np.asarray(out2), np.asarray(out), atol=1e-2, rtol=1e-2)

    print("KERNEL_OK")
</pallas_src>

<mosaic_0001>
module attributes {stable_mosaic.version = 11 : i64} {
  func.func @_kernel_logits_feat(%arg0: i32, %arg1: memref<16x784xf32, #tpu.memory_space<vmem>>, %arg2: memref<784x512xbf16, #tpu.memory_space<vmem>>, %arg3: memref<1x512xf32, #tpu.memory_space<vmem>>, %arg4: memref<512x512xbf16, #tpu.memory_space<vmem>>, %arg5: memref<1x512xf32, #tpu.memory_space<vmem>>, %arg6: memref<512x128xbf16, #tpu.memory_space<vmem>>, %arg7: memref<1x128xf32, #tpu.memory_space<vmem>>, %arg8: memref<128x128xbf16, #tpu.memory_space<vmem>>, %arg9: memref<16x128xbf16, #tpu.memory_space<vmem>>, %arg10: memref<16x128xf32, #tpu.memory_space<vmem>>) attributes {dimension_semantics = [#tpu.dimension_semantics<parallel>], iteration_bounds = array<i64: 1>, scalar_prefetch = 0 : i64, scratch_operands = 0 : i64, tpu.core_type = #tpu.core_type<tc>, window_params = [{transform_indices = @transform_0, window_bounds = array<i64: 16, 784>}, {pipeline_mode = #tpu.pipeline_mode<synchronous>, transform_indices = @transform_1, window_bounds = array<i64: 784, 512>}, {pipeline_mode = #tpu.pipeline_mode<synchronous>, transform_indices = @transform_2, window_bounds = array<i64: 1, 512>}, {pipeline_mode = #tpu.pipeline_mode<synchronous>, transform_indices = @transform_3, window_bounds = array<i64: 512, 512>}, {pipeline_mode = #tpu.pipeline_mode<synchronous>, transform_indices = @transform_4, window_bounds = array<i64: 1, 512>}, {pipeline_mode = #tpu.pipeline_mode<synchronous>, transform_indices = @transform_5, window_bounds = array<i64: 512, 128>}, {pipeline_mode = #tpu.pipeline_mode<synchronous>, transform_indices = @transform_6, window_bounds = array<i64: 1, 128>}, {pipeline_mode = #tpu.pipeline_mode<synchronous>, transform_indices = @transform_7, window_bounds = array<i64: 128, 128>}, {transform_indices = @transform_8, window_bounds = array<i64: 16, 128>}, {transform_indices = @transform_9, window_bounds = array<i64: 16, 128>}]} {
    %c0 = arith.constant 0 : index
    %c0_0 = arith.constant 0 : index
    %0 = vector.load %arg1[%c0, %c0_0] : memref<16x784xf32, #tpu.memory_space<vmem>>, vector<16x784xf32>
    %1 = arith.truncf %0 : vector<16x784xf32> to vector<16x784xbf16>
    %c0_1 = arith.constant 0 : index
    %c0_2 = arith.constant 0 : index
    %2 = vector.load %arg2[%c0_1, %c0_2] : memref<784x512xbf16, #tpu.memory_space<vmem>>, vector<784x512xbf16>
    %cst = arith.constant dense<0.000000e+00> : vector<16x512xf32>
    %3 = tpu.matmul %1, %2, %cst {dimension_numbers = #tpu.dot_dimension_numbers<[1], [0], [0], [1], [0, 0, 1, 1], [], []>} : vector<16x784xbf16>, vector<784x512xbf16>, vector<16x512xf32> -> vector<16x512xf32>
    %c0_3 = arith.constant 0 : index
    %c0_4 = arith.constant 0 : index
    %4 = vector.load %arg3[%c0_3, %c0_4] : memref<1x512xf32, #tpu.memory_space<vmem>>, vector<1x512xf32>
    %5 = vector.broadcast %4 : vector<1x512xf32> to vector<16x512xf32>
    %6 = arith.addf %3, %5 : vector<16x512xf32>
    %cst_5 = arith.constant 0.000000e+00 : f32
    %7 = vector.broadcast %cst_5 : f32 to vector<16x512xf32>
    %8 = arith.maximumf %6, %7 : vector<16x512xf32>
    %9 = arith.truncf %8 : vector<16x512xf32> to vector<16x512xbf16>
    %c0_6 = arith.constant 0 : index
    %c0_7 = arith.constant 0 : index
    %10 = vector.load %arg4[%c0_6, %c0_7] : memref<512x512xbf16, #tpu.memory_space<vmem>>, vector<512x512xbf16>
    %cst_8 = arith.constant dense<0.000000e+00> : vector<16x512xf32>
    %11 = tpu.matmul %9, %10, %cst_8 {dimension_numbers = #tpu.dot_dimension_numbers<[1], [0], [0], [1], [0, 0, 1, 1], [], []>} : vector<16x512xbf16>, vector<512x512xbf16>, vector<16x512xf32> -> vector<16x512xf32>
    %c0_9 = arith.constant 0 : index
    %c0_10 = arith.constant 0 : index
    %12 = vector.load %arg5[%c0_9, %c0_10] : memref<1x512xf32, #tpu.memory_space<vmem>>, vector<1x512xf32>
    %13 = vector.broadcast %12 : vector<1x512xf32> to vector<16x512xf32>
    %14 = arith.addf %11, %13 : vector<16x512xf32>
    %cst_11 = arith.constant 0.000000e+00 : f32
    %15 = vector.broadcast %cst_11 : f32 to vector<16x512xf32>
    %16 = arith.maximumf %14, %15 : vector<16x512xf32>
    %17 = arith.truncf %16 : vector<16x512xf32> to vector<16x512xbf16>
    %c0_12 = arith.constant 0 : index
    %c0_13 = arith.constant 0 : index
    %18 = vector.load %arg6[%c0_12, %c0_13] : memref<512x128xbf16, #tpu.memory_space<vmem>>, vector<512x128xbf16>
    %cst_14 = arith.constant dense<0.000000e+00> : vector<16x128xf32>
    %19 = tpu.matmul %17, %18, %cst_14 {dimension_numbers = #tpu.dot_dimension_numbers<[1], [0], [0], [1], [0, 0, 1, 1], [], []>} : vector<16x512xbf16>, vector<512x128xbf16>, vector<16x128xf32> -> vector<16x128xf32>
    %c0_15 = arith.constant 0 : index
    %c0_16 = arith.constant 0 : index
    %20 = vector.load %arg7[%c0_15, %c0_16] : memref<1x128xf32, #tpu.memory_space<vmem>>, vector<1x128xf32>
    %21 = vector.broadcast %20 : vector<1x128xf32> to vector<16x128xf32>
    %22 = arith.addf %19, %21 : vector<16x128xf32>
    %cst_17 = arith.constant 0.000000e+00 : f32
    %23 = vector.broadcast %cst_17 : f32 to vector<16x128xf32>
    %24 = arith.maximumf %22, %23 : vector<16x128xf32>
    %25 = arith.mulf %24, %24 : vector<16x128xf32>
    %cst_18 = arith.constant dense<0.000000e+00> : vector<16xf32>
    %26 = vector.multi_reduction <add>, %25, %cst_18 [1] : vector<16x128xf32> to vector<16xf32>
    %27 = vector.shape_cast %26 : vector<16xf32> to vector<16x1xf32>
    %cst_19 = arith.constant 1.000000e-24 : f32
    %28 = vector.broadcast %cst_19 : f32 to vector<16x1xf32>
    %29 = arith.maximumf %27, %28 : vector<16x1xf32>
    %30 = math.rsqrt %29 : vector<16x1xf32>
    %31 = vector.broadcast %30 : vector<16x1xf32> to vector<16x128xf32>
    %32 = arith.mulf %24, %31 : vector<16x128xf32>
    %33 = arith.truncf %32 : vector<16x128xf32> to vector<16x128xbf16>
    %c0_20 = arith.constant 0 : index
    %c0_21 = arith.constant 0 : index
    %34 = vector.load %arg8[%c0_20, %c0_21] : memref<128x128xbf16, #tpu.memory_space<vmem>>, vector<128x128xbf16>
    %cst_22 = arith.constant dense<0.000000e+00> : vector<16x128xf32>
    %35 = tpu.matmul %33, %34, %cst_22 {dimension_numbers = #tpu.dot_dimension_numbers<[1], [0], [0], [1], [0, 0, 1, 1], [], []>} : vector<16x128xbf16>, vector<128x128xbf16>, vector<16x128xf32> -> vector<16x128xf32>
    %c0_23 = arith.constant 0 : index
    %c0_24 = arith.constant 0 : index
    %36 = vector.load %arg10[%c0_23, %c0_24] : memref<16x128xf32, #tpu.memory_space<vmem>>, vector<16x128xf32>
    tpu.vector_store %arg10[%c0_23, %c0_24], %22 {strides = array<i32>} : memref<16x128xf32, #tpu.memory_space<vmem>>, vector<16x128xf32>,
    %37 = arith.truncf %35 : vector<16x128xf32> to vector<16x128xbf16>
    %c0_25 = arith.constant 0 : index
    %c0_26 = arith.constant 0 : index
    %38 = vector.load %arg9[%c0_25, %c0_26] : memref<16x128xbf16, #tpu.memory_space<vmem>>, vector<16x128xbf16>
    tpu.vector_store %arg9[%c0_25, %c0_26], %37 {strides = array<i32>} : memref<16x128xbf16, #tpu.memory_space<vmem>>, vector<16x128xbf16>,
    return
  }
  func.func @transform_0(%arg0: i32) -> (i32, i32) {
    %c0_i32 = arith.constant 0 : i32
    %c0_i32_0 = arith.constant 0 : i32
    return %arg0, %c0_i32 : i32, i32
  }
  func.func @transform_1(%arg0: i32) -> (i32, i32) {
    %c0_i32 = arith.constant 0 : i32
    %c0_i32_0 = arith.constant 0 : i32
    %c0_i32_1 = arith.constant 0 : i32
    return %c0_i32, %c0_i32_0 : i32, i32
  }
  func.func @transform_2(%arg0: i32) -> (i32, i32) {
    %c0_i32 = arith.constant 0 : i32
    %c0_i32_0 = arith.constant 0 : i32
    %c0_i32_1 = arith.constant 0 : i32
    return %c0_i32, %c0_i32_0 : i32, i32
  }
  func.func @transform_3(%arg0: i32) -> (i32, i32) {
    %c0_i32 = arith.constant 0 : i32
    %c0_i32_0 = arith.constant 0 : i32
    %c0_i32_1 = arith.constant 0 : i32
    return %c0_i32, %c0_i32_0 : i32, i32
  }
  func.func @transform_4(%arg0: i32) -> (i32, i32) {
    %c0_i32 = arith.constant 0 : i32
    %c0_i32_0 = arith.constant 0 : i32
    %c0_i32_1 = arith.constant 0 : i32
    return %c0_i32, %c0_i32_0 : i32, i32
  }
  func.func @transform_5(%arg0: i32) -> (i32, i32) {
    %c0_i32 = arith.constant 0 : i32
    %c0_i32_0 = arith.constant 0 : i32
    %c0_i32_1 = arith.constant 0 : i32
    return %c0_i32, %c0_i32_0 : i32, i32
  }
  func.func @transform_6(%arg0: i32) -> (i32, i32) {
    %c0_i32 = arith.constant 0 : i32
    %c0_i32_0 = arith.constant 0 : i32
    %c0_i32_1 = arith.constant 0 : i32
    return %c0_i32, %c0_i32_0 : i32, i32
  }
  func.func @transform_7(%arg0: i32) -> (i32, i32) {
    %c0_i32 = arith.constant 0 : i32
    %c0_i32_0 = arith.constant 0 : i32
    %c0_i32_1 = arith.constant 0 : i32
    return %c0_i32, %c0_i32_0 : i32, i32
  }
  func.func @transform_8(%arg0: i32) -> (i32, i32) {
    %c0_i32 = arith.constant 0 : i32
    %c0_i32_0 = arith.constant 0 : i32
    return %arg0, %c0_i32 : i32, i32
  }
  func.func @transform_9(%arg0: i32) -> (i32, i32) {
    %c0_i32 = arith.constant 0 : i32
    %c0_i32_0 = arith.constant 0 : i32
    return %arg0, %c0_i32 : i32, i32
  }
}

</mosaic_0001>

<llo_original>
// kernel: tpu_custom_call.1
$region0: #{tpu_custom_call.1}
  #allocation0 [shape = 'u32[]', space=smem, size = 0x4, offset = 0x4, fixed_abs, tag = 'smem constant byte address 0x4 - core index']
  #allocation1 [shape = 'u32[144,128]{1,0:T(1,128)}', space=vmem, size = 0x12000, scoped, tag = 'internal scratch']
  %s0 = inlined_call_operand.hbm [shape: f32[16,784], index: 0, kind: input, shape index: {}]
  %s1 = inlined_call_operand.hbm [shape: bf16[784,512], index: 1, kind: input, shape index: {}]
  %s2 = inlined_call_operand.vmem [shape: f32[1,512], index: 2, kind: input, shape index: {}]
  %s3 = inlined_call_operand.hbm [shape: bf16[512,512], index: 3, kind: input, shape index: {}]
  %s4 = inlined_call_operand.vmem [shape: f32[1,512], index: 4, kind: input, shape index: {}]
  %s5 = inlined_call_operand.hbm [shape: bf16[512,128], index: 5, kind: input, shape index: {}]
  %s6 = inlined_call_operand.vmem [shape: f32[1,128], index: 6, kind: input, shape index: {}]
  %s7 = inlined_call_operand.hbm [shape: bf16[128,128], index: 7, kind: input, shape index: {}]
  %s8 = inlined_call_operand.hbm [shape: bf16[16,128], index: 8, kind: output, shape index: {0}]
  %s9 = inlined_call_operand.hbm [shape: f32[16,128], index: 9, kind: output, shape index: {1}]
  %10 = xla_tuple %s8, %s9
  %s11 = sld [smem:[#allocation0]]
  $region70: #{tpu_custom_call.1} parent=0
    _
  %s13 = ssub.s32 1, %s11
  %s14 = scalar_select 0, %s13, %s11
  $region1: #{tpu_custom_call.1} parent=0
    #allocation2 [shape = 'u8[57344]{0}', space=vmem, size = 0xe000, scoped, tag = 'input window, operand 0, single buffered']
    #allocation3 [shape = 's32[1]{0}', space=sflag, size = 0x4, scoped, tag = 'scoped memory for tpu_custom_call.1']
    #allocation4 [shape = 's32[1]{0}', space=sflag, size = 0x4, scoped, tag = 'scoped memory for tpu_custom_call.1']
    #allocation5 [shape = 'u8[802816]{0}', space=vmem, size = 0xc4000, scoped, tag = 'input window, operand 1, single buffered']
    #allocation6 [shape = 's32[1]{0}', space=sflag, size = 0x4, scoped, tag = 'scoped memory for tpu_custom_call.1']
    #allocation7 [shape = 'u8[524288]{0}', space=vmem, size = 0x80000, scoped, tag = 'input window, operand 3, single buffered']
    #allocation8 [shape = 'u8[131072]{0}', space=vmem, size = 0x20000, scoped, tag = 'input window, operand 5, single buffered']
    #allocation9 [shape = 's32[1]{0}', space=sflag, size = 0x4, scoped, tag = 'scoped memory for tpu_custom_call.1']
    #allocation10 [shape = 'u8[32768]{0}', space=vmem, size = 0x8000, scoped, tag = 'input window, operand 7, single buffered']
    #allocation11 [shape = 'u8[4096]{0}', space=vmem, size = 0x1000, scoped, tag = 'output window, operand 0, single buffered']
    #allocation12 [shape = 'u8[8192]{0}', space=vmem, size = 0x2000, scoped, tag = 'output window, operand 1, single buffered']
    #allocation13 [shape = 's32[1]{0}', space=sflag, size = 0x4, scoped, tag = 'scoped memory for tpu_custom_call.1']
    %15 = vsyncpa [#allocation3], 0
    %16 = vsyncpa [#allocation6], 0
    %17 = vsyncpa [#allocation9], 0
    %18 = vsyncpa [#allocation4], 0
    %19 = vsyncpa [#allocation13], 0
    // Predicated region
    $region2: #{tpu_custom_call.1} parent=1 // pred_check
      _
    $region3: #{tpu_custom_call.1} parent=1 // pred_check_branch
      %21 = sbr.rel (0) target = $region5
    $region4: #{tpu_custom_call.1} parent=1 // pred_region
      %s23 = ssub.s32 1792, 1792
      %24 = vsyncadd [#allocation3], %s23
      %s25 = sshll.u32 [#allocation2], 4
      %s26 = int_to_ptr.vmem [resolvable:$true] %s25
      %31 = dma.hbm_to_vmem [thread:$0]  %s0, 1792, %s26, [#allocation3], 896, 896, 56
    $region5: #{tpu_custom_call.1} parent=1 // pred_fallthru
      _
    // Predicated region
    $region6: #{tpu_custom_call.1} parent=1 // pred_check
      _
    $region7: #{tpu_custom_call.1} parent=1 // pred_check_branch
      %33 = sbr.rel (0) target = $region9
    $region8: #{tpu_custom_call.1} parent=1 // pred_region
      %s35 = ssub.s32 25088, 25088
      %36 = vsyncadd [#allocation6], %s35
      %s37 = sshll.u32 [#allocation5], 4
      %s38 = int_to_ptr.vmem [resolvable:$true] %s37
      %43 = dma.hbm_to_vmem [thread:$0]  %s1, 25088, %s38, [#allocation6], 256, 256, 16
    $region9: #{tpu_custom_call.1} parent=1 // pred_fallthru
      _
    // Predicated region
    $region10: #{tpu_custom_call.1} parent=1 // pred_check
      _
    $region11: #{tpu_custom_call.1} parent=1 // pred_check_branch
      %45 = sbr.rel (0) target = $region13
    $region12: #{tpu_custom_call.1} parent=1 // pred_region
      _
    $region13: #{tpu_custom_call.1} parent=1 // pred_fallthru
      _
    // Predicated region
    $region14: #{tpu_custom_call.1} parent=1 // pred_check
      _
    $region15: #{tpu_custom_call.1} parent=1 // pred_check_branch
      %47 = sbr.rel (0) target = $region17
    $region16: #{tpu_custom_call.1} parent=1 // pred_region
      %s49 = ssub.s32 16384, 16384
      %50 = vsyncadd [#allocation6], %s49
      %s51 = sshll.u32 [#allocation7], 4
      %s52 = int_to_ptr.vmem [resolvable:$true] %s51
      %57 = dma.hbm_to_vmem [thread:$0]  %s3, 16384, %s52, [#allocation6], 256, 256, 16
    $region17: #{tpu_custom_call.1} parent=1 // pred_fallthru
      _
    // Predicated region
    $region18: #{tpu_custom_call.1} parent=1 // pred_check
      _
    $region19: #{tpu_custom_call.1} parent=1 // pred_check_branch
      %59 = sbr.rel (0) target = $region21
    $region20: #{tpu_custom_call.1} parent=1 // pred_region
      _
    $region21: #{tpu_custom_call.1} parent=1 // pred_fallthru
      _
    // Predicated region
    $region22: #{tpu_custom_call.1} parent=1 // pred_check
      _
    $region23: #{tpu_custom_call.1} parent=1 // pred_check_branch
      %61 = sbr.rel (0) target = $region25
    $region24: #{tpu_custom_call.1} parent=1 // pred_region
      %s63 = ssub.s32 4096, 4096
      %64 = vsyncadd [#allocation9], %s63
      %s65 = sshll.u32 [#allocation8], 4
      %s66 = int_to_ptr.vmem [resolvable:$true] %s65
      %71 = dma.hbm_to_vmem [thread:$0]  %s5, 4096, %s66, [#allocation9], 64, 64, 4
    $region25: #{tpu_custom_call.1} parent=1 // pred_fallthru
      _
    // Predicated region
    $region26: #{tpu_custom_call.1} parent=1 // pred_check
      _
    $region27: #{tpu_custom_call.1} parent=1 // pred_check_branch
      %73 = sbr.rel (0) target = $region29
    $region28: #{tpu_custom_call.1} parent=1 // pred_region
      _
    $region29: #{tpu_custom_call.1} parent=1 // pred_fallthru
      _
    // Predicated region
    $region30: #{tpu_custom_call.1} parent=1 // pred_check
      _
    $region31: #{tpu_custom_call.1} parent=1 // pred_check_branch
      %75 = sbr.rel (0) target = $region33
    $region32: #{tpu_custom_call.1} parent=1 // pred_region
      %s77 = ssub.s32 1024, 1024
      %78 = vsyncadd [#allocation9], %s77
      %s79 = sshll.u32 [#allocation10], 4
      %s80 = int_to_ptr.vmem [resolvable:$true] %s79
      %85 = dma.hbm_to_vmem [thread:$0]  %s7, 1024, %s80, [#allocation9], 64, 64, 4
    $region33: #{tpu_custom_call.1} parent=1 // pred_fallthru
      _
    // Predicated region
    $region34: #{tpu_custom_call.1} parent=1 // pred_check
      _
    $region35: #{tpu_custom_call.1} parent=1 // pred_check_branch
      %87 = sbr.rel (0) target = $region37
    $region36: #{tpu_custom_call.1} parent=1 // pred_region
      %88 = dma.done [#allocation3], 1792
    $region37: #{tpu_custom_call.1} parent=1 // pred_fallthru
      _
    // Predicated region
    $region38: #{tpu_custom_call.1} parent=1 // pred_check
      _
    $region39: #{tpu_custom_call.1} parent=1 // pred_check_branch
      %90 = sbr.rel (0) target = $region41
    $region40: #{tpu_custom_call.1} parent=1 // pred_region
      %91 = dma.done [#allocation6], 25088
    $region41: #{tpu_custom_call.1} parent=1 // pred_fallthru
      _
    // Predicated region
    $region42: #{tpu_custom_call.1} parent=1 // pred_check
      _
    $region43: #{tpu_custom_call.1} parent=1 // pred_check_branch
      %93 = sbr.rel (0) target = $region45
    $region44: #{tpu_custom_call.1} parent=1 // pred_region
      %94 = dma.done [#allocation6], 16384
    $region45: #{tpu_custom_call.1} parent=1 // pred_fallthru
      _
    // Predicated region
    $region46: #{tpu_custom_call.1} parent=1 // pred_check
      _
    $region47: #{tpu_custom_call.1} parent=1 // pred_check_branch
      %96 = sbr.rel (0) target = $region49
    $region48: #{tpu_custom_call.1} parent=1 // pred_region
      %97 = dma.done [#allocation9], 4096
    $region49: #{tpu_custom_call.1} parent=1 // pred_fallthru
      _
    // Predicated region
    $region50: #{tpu_custom_call.1} parent=1 // pred_check
      _
    $region51: #{tpu_custom_call.1} parent=1 // pred_check_branch
      %99 = sbr.rel (0) target = $region53
    $region52: #{tpu_custom_call.1} parent=1 // pred_region
      %100 = dma.done [#allocation9], 1024
    $region53: #{tpu_custom_call.1} parent=1 // pred_fallthru
      _
    %v102 = vld [vmem:[#allocation2] sm:$0xff]
    %v103 = vld [vmem:[#allocation2 + $0x8] sm:$0xff]
    %v104 = vld [vmem:[#allocation2 + $0x10] sm:$0xff]
    %v105 = vld [vmem:[#allocation2 + $0x18] sm:$0xff]
    %v106 = vld [vmem:[#allocation2 + $0x20] sm:$0xff]
    %v107 = vld [vmem:[#allocation2 + $0x28] sm:$0xff]
    %v108 = vld [vmem:[#allocation2 + $0x30] sm:$0xff]
    %v109 = vld [vmem:[#allocation2 + $0x38] sm:$0xff]
    %v110 = vld [vmem:[#allocation2 + $0x40] sm:$0xff]
    %v111 = vld [vmem:[#allocation2 + $0x48] sm:$0xff]
    %v112 = vld [vmem:[#allocation2 + $0x50] sm:$0xff]
    %v113 = vld [vmem:[#allocation2 + $0x58] sm:$0xff]
    %v114 = vld [vmem:[#allocation2 + $0x60] sm:$0xff]
    %v115 = vld [vmem:[#allocation2 + $0x68] sm:$0xff]
    %v116 = vpack.c.bf16 %v109, %v102
    %v117 = vpack.c.bf16 %v110, %v103
    %v118 = vpack.c.bf16 %v111, %v104
    %v119 = vpack.c.bf16 %v112, %v105
    %v120 = vpack.c.bf16 %v113, %v106
    %v121 = vpack.c.bf16 %v114, %v107
    %v122 = vpack.c.bf16 %v115, %v108
    %v123 = vld [vmem:[#allocation5] sm:$0xff]
    %v124 = vld [vmem:[#allocation5 + $0x8] sm:$0xff]
    %v125 = vld [vmem:[#allocation5 + $0x10] sm:$0xff]
    %v126 = vld [vmem:[#allocation5 + $0x18] sm:$0xff]
    %v127 = vld [vmem:[#allocation5 + $0x20] sm:$0xff]
    %v128 = vld [vmem:[#allocation5 + $0x28] sm:$0xff]
    %v129 = vld [vmem:[#allocation5 + $0x30] sm:$0xff]
    %v130 = vld [vmem:[#allocation5 + $0x38] sm:$0xff]
    %v131 = vld [vmem:[#allocation5 + $0x40] sm:$0xff]
    %v132 = vld [vmem:[#allocation5 + $0x48] sm:$0xff]
    %v133 = vld [vmem:[#allocation5 + $0x50] sm:$0xff]
    %v134 = vld [vmem:[#allocation5 + $0x58] sm:$0xff]
    %v135 = vld [vmem:[#allocation5 + $0x60] sm:$0xff]
    %v136 = vld [vmem:[#allocation5 + $0x68] sm:$0xff]
    %v137 = vld [vmem:[#allocation5 + $0x70] sm:$0xff]
    %v138 = vld [vmem:[#allocation5 + $0x78] sm:$0xff]
    %v139 = vld [vmem:[#allocation5 + $0x80] sm:$0xff]
    %v140 = vld [vmem:[#allocation5 + $0x88] sm:$0xff]
    %v141 = vld [vmem:[#allocation5 + $0x90] sm:$0xff]
    %v142 = vld [vmem:[#allocation5 + $0x98] sm:$0xff]
    %v143 = vld [vmem:[#allocation5 + $0xa0] sm:$0xff]
    %v144 = vld [vmem:[#allocation5 + $0xa8] sm:$0xff]
    %v145 = vld [vmem:[#allocation5 + $0xb0] sm:$0xff]
    %v146 = vld [vmem:[#allocation5 + $0xb8] sm:$0xff]
    %v147 = vld [vmem:[#allocation5 + $0xc0] sm:$0xff]
    %v148 = vld [vmem:[#allocation5 + $0xc8] sm:$0xff]
    %v149 = vld [vmem:[#allocation5 + $0xd0] sm:$0xff]
    %v150 = vld [vmem:[#allocation5 + $0xd8] sm:$0xff]
    %v151 = vld [vmem:[#allocation5 + $0xe0] sm:$0xff]
    %v152 = vld [vmem:[#allocation5 + $0xe8] sm:$0xff]
    %v153 = vld [vmem:[#allocation5 + $0xf0] sm:$0xff]
    %v154 = vld [vmem:[#allocation5 + $0xf8] sm:$0xff]
    %v155 = vld [vmem:[#allocation5 + $0x100] sm:$0xff]
    %v156 = vld [vmem:[#allocation5 + $0x108] sm:$0xff]
    %v157 = vld [vmem:[#allocation5 + $0x110] sm:$0xff]
    %v158 = vld [vmem:[#allocation5 + $0x118] sm:$0xff]
    %v159 = vld [vmem:[#allocation5 + $0x120] sm:$0xff]
    %v160 = vld [vmem:[#allocation5 + $0x128] sm:$0xff]
    %v161 = vld [vmem:[#allocation5 + $0x130] sm:$0xff]
    %v162 = vld [vmem:[#allocation5 + $0x138] sm:$0xff]
    %v163 = vld [vmem:[#allocation5 + $0x140] sm:$0xff]
    %v164 = vld [vmem:[#allocation5 + $0x148] sm:$0xff]
    %v165 = vld [vmem:[#allocation5 + $0x150] sm:$0xff]
    %v166 = vld [vmem:[#allocation5 + $0x158] sm:$0xff]
    %v167 = vld [vmem:[#allocation5 + $0x160] sm:$0xff]
    %v168 = vld [vmem:[#allocation5 + $0x168] sm:$0xff]
    %v169 = vld [vmem:[#allocation5 + $0x170] sm:$0xff]
    %v170 = vld [vmem:[#allocation5 + $0x178] sm:$0xff]
    %v171 = vld [vmem:[#allocation5 + $0x180] sm:$0xff]
    %v172 = vld [vmem:[#allocation5 + $0x188] sm:$0xff]
    %v173 = vld [vmem:[#allocation5 + $0x190] sm:$0xff]
    %v174 = vld [vmem:[#allocation5 + $0x198] sm:$0xff]
    %v175 = vld [vmem:[#allocation5 + $0x1a0] sm:$0xff]
    %v176 = vld [vmem:[#allocation5 + $0x1a8] sm:$0xff]
    %v177 = vld [vmem:[#allocation5 + $0x1b0] sm:$0xff]
    %v178 = vld [vmem:[#allocation5 + $0x1b8] sm:$0xff]
    %v179 = vld [vmem:[#allocation5 + $0x1c0] sm:$0xff]
    %v180 = vld [vmem:[#allocation5 + $0x1c8] sm:$0xff]
    %v181 = vld [vmem:[#allocation5 + $0x1d0] sm:$0xff]
    %v182 = vld [vmem:[#allocation5 + $0x1d8] sm:$0xff]
    %v183 = vld [vmem:[#allocation5 + $0x1e0] sm:$0xff]
    %v184 = vld [vmem:[#allocation5 + $0x1e8] sm:$0xff]
    %v185 = vld [vmem:[#allocation5 + $0x1f0] sm:$0xff]
    %v186 = vld [vmem:[#allocation5 + $0x1f8] sm:$0xff]
    %v187 = vld [vmem:[#allocation5 + $0x200] sm:$0xff]
    %v188 = vld [vmem:[#allocation5 + $0x208] sm:$0xff]
    %v189 = vld [vmem:[#allocation5 + $0x210] sm:$0xff]
    %v190 = vld [vmem:[#allocation5 + $0x218] sm:$0xff]
    %v191 = vld [vmem:[#allocation5 + $0x220] sm:$0xff]
    %v192 = vld [vmem:[#allocation5 + $0x228] sm:$0xff]
    %v193 = vld [vmem:[#allocation5 + $0x230] sm:$0xff]
    %v194 = vld [vmem:[#allocation5 + $0x238] sm:$0xff]
    %v195 = vld [vmem:[#allocation5 + $0x240] sm:$0xff]
    %v196 = vld [vmem:[#allocation5 + $0x248] sm:$0xff]
    %v197 = vld [vmem:[#allocation5 + $0x250] sm:$0xff]
    %v198 = vld [vmem:[#allocation5 + $0x258] sm:$0xff]
    %v199 = vld [vmem:[#allocation5 + $0x260] sm:$0xff]
    %v200 = vld [vmem:[#allocation5 + $0x268] sm:$0xff]
    %v201 = vld [vmem:[#allocation5 + $0x270] sm:$0xff]
    %v202 = vld [vmem:[#allocation5 + $0x278] sm:$0xff]
    %v203 = vld [vmem:[#allocation5 + $0x280] sm:$0xff]
    %v204 = vld [vmem:[#allocation5 + $0x288] sm:$0xff]
    %v205 = vld [vmem:[#allocation5 + $0x290] sm:$0xff]
    %v206 = vld [vmem:[#allocation5 + $0x298] sm:$0xff]
    %v207 = vld [vmem:[#allocation5 + $0x2a0] sm:$0xff]
    %v208 = vld [vmem:[#allocation5 + $0x2a8] sm:$0xff]
    %v209 = vld [vmem:[#allocation5 + $0x2b0] sm:$0xff]
    %v210 = vld [vmem:[#allocation5 + $0x2b8] sm:$0xff]
    %v211 = vld [vmem:[#allocation5 + $0x2c0] sm:$0xff]
    %v212 = vld [vmem:[#allocation5 + $0x2c8] sm:$0xff]
    %v213 = vld [vmem:[#allocation5 + $0x2d0] sm:$0xff]
    %v214 = vld [vmem:[#allocation5 + $0x2d8] sm:$0xff]
    %v215 = vld [vmem:[#allocation5 + $0x2e0] sm:$0xff]
    %v216 = vld [vmem:[#allocation5 + $0x2e8] sm:$0xff]
    %v217 = vld [vmem:[#allocation5 + $0x2f0] sm:$0xff]
    %v218 = vld [vmem:[#allocation5 + $0x2f8] sm:$0xff]
    %v219 = vld [vmem:[#allocation5 + $0x300] sm:$0xff]
    %v220 = vld [vmem:[#allocation5 + $0x308] sm:$0xff]
    %v221 = vld [vmem:[#allocation5 + $0x310] sm:$0xff]
    %v222 = vld [vmem:[#allocation5 + $0x318] sm:$0xff]
    %v223 = vld [vmem:[#allocation5 + $0x320] sm:$0xff]
    %v224 = vld [vmem:[#allocation5 + $0x328] sm:$0xff]
    %v225 = vld [vmem:[#allocation5 + $0x330] sm:$0xff]
    %v226 = vld [vmem:[#allocation5 + $0x338] sm:$0xff]
    %v227 = vld [vmem:[#allocation5 + $0x340] sm:$0xff]
    %v228 = vld [vmem:[#allocation5 + $0x348] sm:$0xff]
    %v229 = vld [vmem:[#allocation5 + $0x350] sm:$0xff]
    %v230 = vld [vmem:[#allocation5 + $0x358] sm:$0xff]
    %v231 = vld [vmem:[#allocation5 + $0x360] sm:$0xff]
    %v232 = vld [vmem:[#allocation5 + $0x368] sm:$0xff]
    %v233 = vld [vmem:[#allocation5 + $0x370] sm:$0xff]
    %v234 = vld [vmem:[#allocation5 + $0x378] sm:$0xff]
    %v235 = vld [vmem:[#allocation5 + $0x380] sm:$0xff]
    %v236 = vld [vmem:[#allocation5 + $0x388] sm:$0xff]
    %v237 = vld [vmem:[#allocation5 + $0x390] sm:$0xff]
    %v238 = vld [vmem:[#allocation5 + $0x398] sm:$0xff]
    %v239 = vld [vmem:[#allocation5 + $0x3a0] sm:$0xff]
    %v240 = vld [vmem:[#allocation5 + $0x3a8] sm:$0xff]
    %v241 = vld [vmem:[#allocation5 + $0x3b0] sm:$0xff]
    %v242 = vld [vmem:[#allocation5 + $0x3b8] sm:$0xff]
    %v243 = vld [vmem:[#allocation5 + $0x3c0] sm:$0xff]
    %v244 = vld [vmem:[#allocation5 + $0x3c8] sm:$0xff]
    %v245 = vld [vmem:[#allocation5 + $0x3d0] sm:$0xff]
    %v246 = vld [vmem:[#allocation5 + $0x3d8] sm:$0xff]
    %v247 = vld [vmem:[#allocation5 + $0x3e0] sm:$0xff]
    %v248 = vld [vmem:[#allocation5 + $0x3e8] sm:$0xff]
    %v249 = vld [vmem:[#allocation5 + $0x3f0] sm:$0xff]
    %v250 = vld [vmem:[#allocation5 + $0x3f8] sm:$0xff]
    %v251 = vld [vmem:[#allocation5 + $0x400] sm:$0xff]
    %v252 = vld [vmem:[#allocation5 + $0x408] sm:$0xff]
    %v253 = vld [vmem:[#allocation5 + $0x410] sm:$0xff]
    %v254 = vld [vmem:[#allocation5 + $0x418] sm:$0xff]
    %v255 = vld [vmem:[#allocation5 + $0x420] sm:$0xff]
    %v256 = vld [vmem:[#allocation5 + $0x428] sm:$0xff]
    %v257 = vld [vmem:[#allocation5 + $0x430] sm:$0xff]
    %v258 = vld [vmem:[#allocation5 + $0x438] sm:$0xff]
    %v259 = vld [vmem:[#allocation5 + $0x440] sm:$0xff]
    %v260 = vld [vmem:[#allocation5 + $0x448] sm:$0xff]
    %v261 = vld [vmem:[#allocation5 + $0x450] sm:$0xff]
    %v262 = vld [vmem:[#allocation5 + $0x458] sm:$0xff]
    %v263 = vld [vmem:[#allocation5 + $0x460] sm:$0xff]
    %v264 = vld [vmem:[#allocation5 + $0x468] sm:$0xff]
    %v265 = vld [vmem:[#allocation5 + $0x470] sm:$0xff]
    %v266 = vld [vmem:[#allocation5 + $0x478] sm:$0xff]
    %v267 = vld [vmem:[#allocation5 + $0x480] sm:$0xff]
    %v268 = vld [vmem:[#allocation5 + $0x488] sm:$0xff]
    %v269 = vld [vmem:[#allocation5 + $0x490] sm:$0xff]
    %v270 = vld [vmem:[#allocation5 + $0x498] sm:$0xff]
    %v271 = vld [vmem:[#allocation5 + $0x4a0] sm:$0xff]
    %v272 = vld [vmem:[#allocation5 + $0x4a8] sm:$0xff]
    %v273 = vld [vmem:[#allocation5 + $0x4b0] sm:$0xff]
    %v274 = vld [vmem:[#allocation5 + $0x4b8] sm:$0xff]
    %v275 = vld [vmem:[#allocation5 + $0x4c0] sm:$0xff]
    %v276 = vld [vmem:[#allocation5 + $0x4c8] sm:$0xff]
    %v277 = vld [vmem:[#allocation5 + $0x4d0] sm:$0xff]
    %v278 = vld [vmem:[#allocation5 + $0x4d8] sm:$0xff]
    %v279 = vld [vmem:[#allocation5 + $0x4e0] sm:$0xff]
    %v280 = vld [vmem:[#allocation5 + $0x4e8] sm:$0xff]
    %v281 = vld [vmem:[#allocation5 + $0x4f0] sm:$0xff]
    %v282 = vld [vmem:[#allocation5 + $0x4f8] sm:$0xff]
    %v283 = vld [vmem:[#allocation5 + $0x500] sm:$0xff]
    %v284 = vld [vmem:[#allocation5 + $0x508] sm:$0xff]
    %v285 = vld [vmem:[#allocation5 + $0x510] sm:$0xff]
    %v286 = vld [vmem:[#allocation5 + $0x518] sm:$0xff]
    %v287 = vld [vmem:[#allocation5 + $0x520] sm:$0xff]
    %v288 = vld [vmem:[#allocation5 + $0x528] sm:$0xff]
    %v289 = vld [vmem:[#allocation5 + $0x530] sm:$0xff]
    %v290 = vld [vmem:[#allocation5 + $0x538] sm:$0xff]
    %v291 = vld [vmem:[#allocation5 + $0x540] sm:$0xff]
    %v292 = vld [vmem:[#allocation5 + $0x548] sm:$0xff]
    %v293 = vld [vmem:[#allocation5 + $0x550] sm:$0xff]
    %v294 = vld [vmem:[#allocation5 + $0x558] sm:$0xff]
    %v295 = vld [vmem:[#allocation5 + $0x560] sm:$0xff]
    %v296 = vld [vmem:[#allocation5 + $0x568] sm:$0xff]
    %v297 = vld [vmem:[#allocation5 + $0x570] sm:$0xff]
    %v298 = vld [vmem:[#allocation5 + $0x578] sm:$0xff]
    %v299 = vld [vmem:[#allocation5 + $0x580] sm:$0xff]
    %v300 = vld [vmem:[#allocation5 + $0x588] sm:$0xff]
    %v301 = vld [vmem:[#allocation5 + $0x590] sm:$0xff]
    %v302 = vld [vmem:[#allocation5 + $0x598] sm:$0xff]
    %v303 = vld [vmem:[#allocation5 + $0x5a0] sm:$0xff]
    %v304 = vld [vmem:[#allocation5 + $0x5a8] sm:$0xff]
    %v305 = vld [vmem:[#allocation5 + $0x5b0] sm:$0xff]
    %v306 = vld [vmem:[#allocation5 + $0x5b8] sm:$0xff]
    %v307 = vld [vmem:[#allocation5 + $0x5c0] sm:$0xff]
    %v308 = vld [vmem:[#allocation5 + $0x5c8] sm:$0xff]
    %v309 = vld [vmem:[#allocation5 + $0x5d0] sm:$0xff]
    %v310 = vld [vmem:[#allocation5 + $0x5d8] sm:$0xff]
    %v311 = vld [vmem:[#allocation5 + $0x5e0] sm:$0xff]
    %v312 = vld [vmem:[#allocation5 + $0x5e8] sm:$0xff]
    %v313 = vld [vmem:[#allocation5 + $0x5f0] sm:$0xff]
    %v314 = vld [vmem:[#allocation5 + $0x5f8] sm:$0xff]
    %v315 = vld [vmem:[#allocation5 + $0x600] sm:$0xff]
    %v316 = vld [vmem:[#allocation5 + $0x608] sm:$0xff]
    %v317 = vld [vmem:[#allocation5 + $0x610] sm:$0xff]
    %v318 = vld [vmem:[#allocation5 + $0x618] sm:$0xff]
    %v319 = vld [vmem:[%s2] sm:$0xf]
    %v321 = vlaneseq
    %v322 = vshrl.u32 %v321, 7
    %v323 = vsub.s32 0, %v322
    %v324 = vrot.slane %v319, %v323
    %v325 = vlaneseq
    %v326 = vshrl.u32 %v325, 7
    %v327 = vsub.s32 1, %v326
    %v328 = vrot.slane %v319, %v327
    %v329 = vlaneseq
    %v330 = vshrl.u32 %v329, 7
    %v331 = vsub.s32 2, %v330
    %v332 = vrot.slane %v319, %v331
    %v333 = vlaneseq
    %v334 = vshrl.u32 %v333, 7
    %v335 = vsub.s32 3, %v334
    %v336 = vrot.slane %v319, %v335
    %v537 = vunpack.c.l.b16 %v123
    %v538 = vunpack.c.h.b16 %v123
    %v539 = vunpack.c.l.b16 %v124
    %v540 = vunpack.c.h.b16 %v124
    %v541 = vunpack.c.l.b16 %v125
    %v542 = vunpack.c.h.b16 %v125
    %v543 = vunpack.c.l.b16 %v126
    %v544 = vunpack.c.h.b16 %v126
    %v545 = vunpack.c.l.b16 %v127
    %v546 = vunpack.c.h.b16 %v127
    %v547 = vunpack.c.l.b16 %v128
    %v548 = vunpack.c.h.b16 %v128
    %v549 = vunpack.c.l.b16 %v129
    %v550 = vunpack.c.h.b16 %v129
    %v551 = vunpack.c.l.b16 %v130
    %v552 = vunpack.c.h.b16 %v130
    %v553 = vunpack.c.l.b16 %v131
    %v554 = vunpack.c.h.b16 %v131
    %v555 = vunpack.c.l.b16 %v132
    %v556 = vunpack.c.h.b16 %v132
    %v557 = vunpack.c.l.b16 %v133
    %v558 = vunpack.c.h.b16 %v133
    %v559 = vunpack.c.l.b16 %v134
    %v560 = vunpack.c.h.b16 %v134
    %v561 = vunpack.c.l.b16 %v135
    %v562 = vunpack.c.h.b16 %v135
    %v563 = vunpack.c.l.b16 %v136
    %v564 = vunpack.c.h.b16 %v136
    %v565 = vunpack.c.l.b16 %v137
    %v566 = vunpack.c.h.b16 %v137
    %v567 = vunpack.c.l.b16 %v138
    %v568 = vunpack.c.h.b16 %v138
    %v569 = vunpack.c.l.b16 %v139
    %v570 = vunpack.c.h.b16 %v139
    %v571 = vunpack.c.l.b16 %v140
    %v572 = vunpack.c.h.b16 %v140
    %v573 = vunpack.c.l.b16 %v141
    %v574 = vunpack.c.h.b16 %v141
    %v575 = vunpack.c.l.b16 %v142
    %v576 = vunpack.c.h.b16 %v142
    %v577 = vunpack.c.l.b16 %v143
    %v578 = vunpack.c.h.b16 %v143
    %v579 = vunpack.c.l.b16 %v144
    %v580 = vunpack.c.h.b16 %v144
    %v581 = vunpack.c.l.b16 %v145
    %v582 = vunpack.c.h.b16 %v145
    %v583 = vunpack.c.l.b16 %v146
    %v584 = vunpack.c.h.b16 %v146
    %v585 = vunpack.c.l.b16 %v147
    %v586 = vunpack.c.h.b16 %v147
    %v587 = vunpack.c.l.b16 %v148
    %v588 = vunpack.c.h.b16 %v148
    %v589 = vunpack.c.l.b16 %v149
    %v590 = vunpack.c.h.b16 %v149
    %v591 = vunpack.c.l.b16 %v150
    %v592 = vunpack.c.h.b16 %v150
    %v593 = vunpack.c.l.b16 %v151
    %v594 = vunpack.c.h.b16 %v151
    %v595 = vunpack.c.l.b16 %v152
    %v596 = vunpack.c.h.b16 %v152
    %v597 = vunpack.c.l.b16 %v153
    %v598 = vunpack.c.h.b16 %v153
    %v599 = vunpack.c.l.b16 %v154
    %v600 = vunpack.c.h.b16 %v154
    %v601 = vunpack.c.l.b16 %v155
    %v602 = vunpack.c.h.b16 %v155
    %v603 = vunpack.c.l.b16 %v156
    %v604 = vunpack.c.h.b16 %v156
    %v605 = vunpack.c.l.b16 %v157
    %v606 = vunpack.c.h.b16 %v157
    %v607 = vunpack.c.l.b16 %v158
    %v608 = vunpack.c.h.b16 %v158
    %v609 = vunpack.c.l.b16 %v159
    %v610 = vunpack.c.h.b16 %v159
    %v611 = vunpack.c.l.b16 %v160
    %v612 = vunpack.c.h.b16 %v160
    %v613 = vunpack.c.l.b16 %v161
    %v614 = vunpack.c.h.b16 %v161
    %v615 = vunpack.c.l.b16 %v162
    %v616 = vunpack.c.h.b16 %v162
    %v617 = vunpack.c.l.b16 %v163
    %v618 = vunpack.c.h.b16 %v163
    %v619 = vunpack.c.l.b16 %v164
    %v620 = vunpack.c.h.b16 %v164
    %v621 = vunpack.c.l.b16 %v165
    %v622 = vunpack.c.h.b16 %v165
    %v623 = vunpack.c.l.b16 %v166
    %v624 = vunpack.c.h.b16 %v166
    %v625 = vunpack.c.l.b16 %v167
    %v626 = vunpack.c.h.b16 %v167
    %v627 = vunpack.c.l.b16 %v168
    %v628 = vunpack.c.h.b16 %v168
    %v629 = vunpack.c.l.b16 %v169
    %v630 = vunpack.c.h.b16 %v169
    %v631 = vunpack.c.l.b16 %v170
    %v632 = vunpack.c.h.b16 %v170
    %v633 = vunpack.c.l.b16 %v171
    %v634 = vunpack.c.h.b16 %v171
    %v635 = vunpack.c.l.b16 %v172
    %v636 = vunpack.c.h.b16 %v172
    %v637 = vunpack.c.l.b16 %v173
    %v638 = vunpack.c.h.b16 %v173
    %v639 = vunpack.c.l.b16 %v174
    %v640 = vunpack.c.h.b16 %v174
    %v641 = vunpack.c.l.b16 %v175
    %v642 = vunpack.c.h.b16 %v175
    %v643 = vunpack.c.l.b16 %v176
    %v644 = vunpack.c.h.b16 %v176
    %v645 = vunpack.c.l.b16 %v177
    %v646 = vunpack.c.h.b16 %v177
    %v647 = vunpack.c.l.b16 %v178
    %v648 = vunpack.c.h.b16 %v178
    %v649 = vunpack.c.l.b16 %v179
    %v650 = vunpack.c.h.b16 %v179
    %v651 = vunpack.c.l.b16 %v180
    %v652 = vunpack.c.h.b16 %v180
    %v653 = vunpack.c.l.b16 %v181
    %v654 = vunpack.c.h.b16 %v181
    %v655 = vunpack.c.l.b16 %v182
    %v656 = vunpack.c.h.b16 %v182
    %v657 = vunpack.c.l.b16 %v183
    %v658 = vunpack.c.h.b16 %v183
    %v659 = vunpack.c.l.b16 %v184
    %v660 = vunpack.c.h.b16 %v184
    %v661 = vunpack.c.l.b16 %v185
    %v662 = vunpack.c.h.b16 %v185
    %v663 = vunpack.c.l.b16 %v186
    %v664 = vunpack.c.h.b16 %v186
    %v665 = vunpack.c.l.b16 %v187
    %v666 = vunpack.c.h.b16 %v187
    %v667 = vunpack.c.l.b16 %v188
    %v668 = vunpack.c.h.b16 %v188
    %v669 = vunpack.c.l.b16 %v189
    %v670 = vunpack.c.h.b16 %v189
    %v671 = vunpack.c.l.b16 %v190
    %v672 = vunpack.c.h.b16 %v190
    %v673 = vunpack.c.l.b16 %v191
    %v674 = vunpack.c.h.b16 %v191
    %v675 = vunpack.c.l.b16 %v192
    %v676 = vunpack.c.h.b16 %v192
    %v677 = vunpack.c.l.b16 %v193
    %v678 = vunpack.c.h.b16 %v193
    %v679 = vunpack.c.l.b16 %v194
    %v680 = vunpack.c.h.b16 %v194
    %v681 = vunpack.c.l.b16 %v195
    %v682 = vunpack.c.h.b16 %v195
    %v683 = vunpack.c.l.b16 %v196
    %v684 = vunpack.c.h.b16 %v196
    %v685 = vunpack.c.l.b16 %v197
    %v686 = vunpack.c.h.b16 %v197
    %v687 = vunpack.c.l.b16 %v198
    %v688 = vunpack.c.h.b16 %v198
    %v689 = vunpack.c.l.b16 %v199
    %v690 = vunpack.c.h.b16 %v199
    %v691 = vunpack.c.l.b16 %v200
    %v692 = vunpack.c.h.b16 %v200
    %v693 = vunpack.c.l.b16 %v201
    %v694 = vunpack.c.h.b16 %v201
    %v695 = vunpack.c.l.b16 %v202
    %v696 = vunpack.c.h.b16 %v202
    %v697 = vunpack.c.l.b16 %v203
    %v698 = vunpack.c.h.b16 %v203
    %v699 = vunpack.c.l.b16 %v204
    %v700 = vunpack.c.h.b16 %v204
    %v701 = vunpack.c.l.b16 %v205
    %v702 = vunpack.c.h.b16 %v205
    %v703 = vunpack.c.l.b16 %v206
    %v704 = vunpack.c.h.b16 %v206
    %v705 = vunpack.c.l.b16 %v207
    %v706 = vunpack.c.h.b16 %v207
    %v707 = vunpack.c.l.b16 %v208
    %v708 = vunpack.c.h.b16 %v208
    %v709 = vunpack.c.l.b16 %v209
    %v710 = vunpack.c.h.b16 %v209
    %v711 = vunpack.c.l.b16 %v210
    %v712 = vunpack.c.h.b16 %v210
    %v713 = vunpack.c.l.b16 %v211
    %v714 = vunpack.c.h.b16 %v211
    %v715 = vunpack.c.l.b16 %v212
    %v716 = vunpack.c.h.b16 %v212
    %v717 = vunpack.c.l.b16 %v213
    %v718 = vunpack.c.h.b16 %v213
    %v719 = vunpack.c.l.b16 %v214
    %v720 = vunpack.c.h.b16 %v214
    %v721 = vunpack.c.l.b16 %v215
    %v722 = vunpack.c.h.b16 %v215
    %v723 = vunpack.c.l.b16 %v216
    %v724 = vunpack.c.h.b16 %v216
    %v725 = vunpack.c.l.b16 %v217
    %v726 = vunpack.c.h.b16 %v217
    %v727 = vunpack.c.l.b16 %v218
    %v728 = vunpack.c.h.b16 %v218
    %v729 = vunpack.c.l.b16 %v219
    %v730 = vunpack.c.h.b16 %v219
    %v731 = vunpack.c.l.b16 %v220
    %v732 = vunpack.c.h.b16 %v220
    %v733 = vunpack.c.l.b16 %v221
    %v734 = vunpack.c.h.b16 %v221
    %v735 = vunpack.c.l.b16 %v222
    %v736 = vunpack.c.h.b16 %v222
    %v737 = vunpack.c.l.b16 %v223
    %v738 = vunpack.c.h.b16 %v223
    %v739 = vunpack.c.l.b16 %v224
    %v740 = vunpack.c.h.b16 %v224
    %v741 = vunpack.c.l.b16 %v225
    %v742 = vunpack.c.h.b16 %v225
    %v743 = vunpack.c.l.b16 %v226
    %v744 = vunpack.c.h.b16 %v226
    %v745 = vunpack.c.l.b16 %v227
    %v746 = vunpack.c.h.b16 %v227
    %v747 = vunpack.c.l.b16 %v228
    %v748 = vunpack.c.h.b16 %v228
    %v749 = vunpack.c.l.b16 %v229
    %v750 = vunpack.c.h.b16 %v229
    %v751 = vunpack.c.l.b16 %v230
    %v752 = vunpack.c.h.b16 %v230
    %v753 = vunpack.c.l.b16 %v231
    %v754 = vunpack.c.h.b16 %v231
    %v755 = vunpack.c.l.b16 %v232
    %v756 = vunpack.c.h.b16 %v232
    %v757 = vunpack.c.l.b16 %v233
    %v758 = vunpack.c.h.b16 %v233
    %v759 = vunpack.c.l.b16 %v234
    %v760 = vunpack.c.h.b16 %v234
    %v761 = vunpack.c.l.b16 %v235
    %v762 = vunpack.c.h.b16 %v235
    %v763 = vunpack.c.l.b16 %v236
    %v764 = vunpack.c.h.b16 %v236
    %v765 = vunpack.c.l.b16 %v237
    %v766 = vunpack.c.h.b16 %v237
    %v767 = vunpack.c.l.b16 %v238
    %v768 = vunpack.c.h.b16 %v238
    %v769 = vunpack.c.l.b16 %v239
    %v770 = vunpack.c.h.b16 %v239
    %v771 = vunpack.c.l.b16 %v240
    %v772 = vunpack.c.h.b16 %v240
    %v773 = vunpack.c.l.b16 %v241
    %v774 = vunpack.c.h.b16 %v241
    %v775 = vunpack.c.l.b16 %v242
    %v776 = vunpack.c.h.b16 %v242
    %v777 = vunpack.c.l.b16 %v243
    %v778 = vunpack.c.h.b16 %v243
    %v779 = vunpack.c.l.b16 %v244
    %v780 = vunpack.c.h.b16 %v244
    %v781 = vunpack.c.l.b16 %v245
    %v782 = vunpack.c.h.b16 %v245
    %v783 = vunpack.c.l.b16 %v246
    %v784 = vunpack.c.h.b16 %v246
    %v785 = vunpack.c.l.b16 %v247
    %v786 = vunpack.c.h.b16 %v247
    %v787 = vunpack.c.l.b16 %v248
    %v788 = vunpack.c.h.b16 %v248
    %v789 = vunpack.c.l.b16 %v249
    %v790 = vunpack.c.h.b16 %v249
    %v791 = vunpack.c.l.b16 %v250
    %v792 = vunpack.c.h.b16 %v250
    %v793 = vunpack.c.l.b16 %v251
    %v794 = vunpack.c.h.b16 %v251
    %v795 = vunpack.c.l.b16 %v252
    %v796 = vunpack.c.h.b16 %v252
    %v797 = vunpack.c.l.b16 %v253
    %v798 = vunpack.c.h.b16 %v253
    %v799 = vunpack.c.l.b16 %v254
    %v800 = vunpack.c.h.b16 %v254
    %v801 = vunpack.c.l.b16 %v255
    %v802 = vunpack.c.h.b16 %v255
    %v803 = vunpack.c.l.b16 %v256
    %v804 = vunpack.c.h.b16 %v256
    %v805 = vunpack.c.l.b16 %v257
    %v806 = vunpack.c.h.b16 %v257
    %v807 = vunpack.c.l.b16 %v258
    %v808 = vunpack.c.h.b16 %v258
    %v809 = vunpack.c.l.b16 %v259
    %v810 = vunpack.c.h.b16 %v259
    %v811 = vunpack.c.l.b16 %v260
    %v812 = vunpack.c.h.b16 %v260
    %v813 = vunpack.c.l.b16 %v261
    %v814 = vunpack.c.h.b16 %v261
    %v815 = vunpack.c.l.b16 %v262
    %v816 = vunpack.c.h.b16 %v262
    %v817 = vunpack.c.l.b16 %v263
    %v818 = vunpack.c.h.b16 %v263
    %v819 = vunpack.c.l.b16 %v264
    %v820 = vunpack.c.h.b16 %v264
    %v821 = vunpack.c.l.b16 %v265
    %v822 = vunpack.c.h.b16 %v265
    %v823 = vunpack.c.l.b16 %v266
    %v824 = vunpack.c.h.b16 %v266
    %v825 = vunpack.c.l.b16 %v267
    %v826 = vunpack.c.h.b16 %v267
    %v827 = vunpack.c.l.b16 %v268
    %v828 = vunpack.c.h.b16 %v268
    %v829 = vunpack.c.l.b16 %v269
    %v830 = vunpack.c.h.b16 %v269
    %v831 = vunpack.c.l.b16 %v270
    %v832 = vunpack.c.h.b16 %v270
    %v833 = vunpack.c.l.b16 %v271
    %v834 = vunpack.c.h.b16 %v271
    %v835 = vunpack.c.l.b16 %v272
    %v836 = vunpack.c.h.b16 %v272
    %v837 = vunpack.c.l.b16 %v273
    %v838 = vunpack.c.h.b16 %v273
    %v839 = vunpack.c.l.b16 %v274
    %v840 = vunpack.c.h.b16 %v274
    %v841 = vunpack.c.l.b16 %v275
    %v842 = vunpack.c.h.b16 %v275
    %v843 = vunpack.c.l.b16 %v276
    %v844 = vunpack.c.h.b16 %v276
    %v845 = vunpack.c.l.b16 %v277
    %v846 = vunpack.c.h.b16 %v277
    %v847 = vunpack.c.l.b16 %v278
    %v848 = vunpack.c.h.b16 %v278
    %v849 = vunpack.c.l.b16 %v279
    %v850 = vunpack.c.h.b16 %v279
    %v851 = vunpack.c.l.b16 %v280
    %v852 = vunpack.c.h.b16 %v280
    %v853 = vunpack.c.l.b16 %v281
    %v854 = vunpack.c.h.b16 %v281
    %v855 = vunpack.c.l.b16 %v282
    %v856 = vunpack.c.h.b16 %v282
    %v857 = vunpack.c.l.b16 %v283
    %v858 = vunpack.c.h.b16 %v283
    %v859 = vunpack.c.l.b16 %v284
    %v860 = vunpack.c.h.b16 %v284
    %v861 = vunpack.c.l.b16 %v285
    %v862 = vunpack.c.h.b16 %v285
    %v863 = vunpack.c.l.b16 %v286
    %v864 = vunpack.c.h.b16 %v286
    %v865 = vunpack.c.l.b16 %v287
    %v866 = vunpack.c.h.b16 %v287
    %v867 = vunpack.c.l.b16 %v288
    %v868 = vunpack.c.h.b16 %v288
    %v869 = vunpack.c.l.b16 %v289
    %v870 = vunpack.c.h.b16 %v289
    %v871 = vunpack.c.l.b16 %v290
    %v872 = vunpack.c.h.b16 %v290
    %v873 = vunpack.c.l.b16 %v291
    %v874 = vunpack.c.h.b16 %v291
    %v875 = vunpack.c.l.b16 %v292
    %v876 = vunpack.c.h.b16 %v292
    %v877 = vunpack.c.l.b16 %v293
    %v878 = vunpack.c.h.b16 %v293
    %v879 = vunpack.c.l.b16 %v294
    %v880 = vunpack.c.h.b16 %v294
    %v881 = vunpack.c.l.b16 %v295
    %v882 = vunpack.c.h.b16 %v295
    %v883 = vunpack.c.l.b16 %v296
    %v884 = vunpack.c.h.b16 %v296
    %v885 = vunpack.c.l.b16 %v297
    %v886 = vunpack.c.h.b16 %v297
    %v887 = vunpack.c.l.b16 %v298
    %v888 = vunpack.c.h.b16 %v298
    %v889 = vunpack.c.l.b16 %v299
    %v890 = vunpack.c.h.b16 %v299
    %v891 = vunpack.c.l.b16 %v300
    %v892 = vunpack.c.h.b16 %v300
    %v893 = vunpack.c.l.b16 %v301
    %v894 = vunpack.c.h.b16 %v301
    %v895 = vunpack.c.l.b16 %v302
    %v896 = vunpack.c.h.b16 %v302
    %v897 = vunpack.c.l.b16 %v303
    %v898 = vunpack.c.h.b16 %v303
    %v899 = vunpack.c.l.b16 %v304
    %v900 = vunpack.c.h.b16 %v304
    %v901 = vunpack.c.l.b16 %v305
    %v902 = vunpack.c.h.b16 %v305
    %v903 = vunpack.c.l.b16 %v306
    %v904 = vunpack.c.h.b16 %v306
    %v905 = vunpack.c.l.b16 %v307
    %v906 = vunpack.c.h.b16 %v307
    %v907 = vunpack.c.l.b16 %v308
    %v908 = vunpack.c.h.b16 %v308
    %v909 = vunpack.c.l.b16 %v309
    %v910 = vunpack.c.h.b16 %v309
    %v911 = vunpack.c.l.b16 %v310
    %v912 = vunpack.c.h.b16 %v310
    %v913 = vunpack.c.l.b16 %v311
    %v914 = vunpack.c.h.b16 %v311
    %v915 = vunpack.c.l.b16 %v312
    %v916 = vunpack.c.h.b16 %v312
    %v917 = vunpack.c.l.b16 %v313
    %v918 = vunpack.c.h.b16 %v313
    %v919 = vunpack.c.l.b16 %v314
    %v920 = vunpack.c.h.b16 %v314
    %v921 = vunpack.c.l.b16 %v315
    %v922 = vunpack.c.h.b16 %v315
    %v923 = vunpack.c.l.b16 %v316
    %v924 = vunpack.c.h.b16 %v316
    %v925 = vunpack.c.l.b16 %v317
    %v926 = vunpack.c.h.b16 %v317
    %v927 = vunpack.c.l.b16 %v318
    %v928 = vunpack.c.h.b16 %v318
    %v929 = vpack.c.b16 %v541, %v537
    %v930 = vpack.c.b16 %v542, %v538
    %v931 = vpack.c.b16 %v543, %v539
    %v932 = vpack.c.b16 %v544, %v540
    %v933 = vpack.c.b16 %v549, %v545
    %v934 = vpack.c.b16 %v550, %v546
    %v935 = vpack.c.b16 %v551, %v547
    %v936 = vpack.c.b16 %v552, %v548
    %v937 = vpack.c.b16 %v557, %v553
    %v938 = vpack.c.b16 %v558, %v554
    %v939 = vpack.c.b16 %v559, %v555
    %v940 = vpack.c.b16 %v560, %v556
    %v941 = vpack.c.b16 %v565, %v561
    %v942 = vpack.c.b16 %v566, %v562
    %v943 = vpack.c.b16 %v567, %v563
    %v944 = vpack.c.b16 %v568, %v564
    %v945 = vpack.c.b16 %v573, %v569
    %v946 = vpack.c.b16 %v574, %v570
    %v947 = vpack.c.b16 %v575, %v571
    %v948 = vpack.c.b16 %v576, %v572
    %v949 = vpack.c.b16 %v581, %v577
    %v950 = vpack.c.b16 %v582, %v578
    %v951 = vpack.c.b16 %v583, %v579
    %v952 = vpack.c.b16 %v584, %v580
    %v953 = vpack.c.b16 %v589, %v585
    %v954 = vpack.c.b16 %v590, %v586
    %v955 = vpack.c.b16 %v591, %v587
    %v956 = vpack.c.b16 %v592, %v588
    %v957 = vpack.c.b16 %v597, %v593
    %v958 = vpack.c.b16 %v598, %v594
    %v959 = vpack.c.b16 %v599, %v595
    %v960 = vpack.c.b16 %v600, %v596
    %v961 = vpack.c.b16 %v605, %v601
    %v962 = vpack.c.b16 %v606, %v602
    %v963 = vpack.c.b16 %v607, %v603
    %v964 = vpack.c.b16 %v608, %v604
    %v965 = vpack.c.b16 %v613, %v609
    %v966 = vpack.c.b16 %v614, %v610
    %v967 = vpack.c.b16 %v615, %v611
    %v968 = vpack.c.b16 %v616, %v612
    %v969 = vpack.c.b16 %v621, %v617
    %v970 = vpack.c.b16 %v622, %v618
    %v971 = vpack.c.b16 %v623, %v619
    %v972 = vpack.c.b16 %v624, %v620
    %v973 = vpack.c.b16 %v629, %v625
    %v974 = vpack.c.b16 %v630, %v626
    %v975 = vpack.c.b16 %v631, %v627
    %v976 = vpack.c.b16 %v632, %v628
    %v977 = vpack.c.b16 %v637, %v633
    %v978 = vpack.c.b16 %v638, %v634
    %v979 = vpack.c.b16 %v639, %v635
    %v980 = vpack.c.b16 %v640, %v636
    %v981 = vpack.c.b16 %v645, %v641
    %v982 = vpack.c.b16 %v646, %v642
    %v983 = vpack.c.b16 %v647, %v643
    %v984 = vpack.c.b16 %v648, %v644
    %v985 = vpack.c.b16 %v653, %v649
    %v986 = vpack.c.b16 %v654, %v650
    %v987 = vpack.c.b16 %v655, %v651
    %v988 = vpack.c.b16 %v656, %v652
    %v989 = vpack.c.b16 %v661, %v657
    %v990 = vpack.c.b16 %v662, %v658
    %v991 = vpack.c.b16 %v663, %v659
    %v992 = vpack.c.b16 %v664, %v660
    %v993 = vpack.c.b16 %v669, %v665
    %v994 = vpack.c.b16 %v670, %v666
    %v995 = vpack.c.b16 %v671, %v667
    %v996 = vpack.c.b16 %v672, %v668
    %v997 = vpack.c.b16 %v677, %v673
    %v998 = vpack.c.b16 %v678, %v674
    %v999 = vpack.c.b16 %v679, %v675
    %v1000 = vpack.c.b16 %v680, %v676
    %v1001 = vpack.c.b16 %v685, %v681
    %v1002 = vpack.c.b16 %v686, %v682
    %v1003 = vpack.c.b16 %v687, %v683
    %v1004 = vpack.c.b16 %v688, %v684
    %v1005 = vpack.c.b16 %v693, %v689
    %v1006 = vpack.c.b16 %v694, %v690
    %v1007 = vpack.c.b16 %v695, %v691
    %v1008 = vpack.c.b16 %v696, %v692
    %v1009 = vpack.c.b16 %v701, %v697
    %v1010 = vpack.c.b16 %v702, %v698
    %v1011 = vpack.c.b16 %v703, %v699
    %v1012 = vpack.c.b16 %v704, %v700
    %v1013 = vpack.c.b16 %v709, %v705
    %v1014 = vpack.c.b16 %v710, %v706
    %v1015 = vpack.c.b16 %v711, %v707
    %v1016 = vpack.c.b16 %v712, %v708
    %v1017 = vpack.c.b16 %v717, %v713
    %v1018 = vpack.c.b16 %v718, %v714
    %v1019 = vpack.c.b16 %v719, %v715
    %v1020 = vpack.c.b16 %v720, %v716
    %v1021 = vpack.c.b16 %v725, %v721
    %v1022 = vpack.c.b16 %v726, %v722
    %v1023 = vpack.c.b16 %v727, %v723
    %v1024 = vpack.c.b16 %v728, %v724
    %v1025 = vpack.c.b16 %v733, %v729
    %v1026 = vpack.c.b16 %v734, %v730
    %v1027 = vpack.c.b16 %v735, %v731
    %v1028 = vpack.c.b16 %v736, %v732
    %v1029 = vpack.c.b16 %v741, %v737
    %v1030 = vpack.c.b16 %v742, %v738
    %v1031 = vpack.c.b16 %v743, %v739
    %v1032 = vpack.c.b16 %v744, %v740
    %v1033 = vpack.c.b16 %v749, %v745
    %v1034 = vpack.c.b16 %v750, %v746
    %v1035 = vpack.c.b16 %v751, %v747
    %v1036 = vpack.c.b16 %v752, %v748
    %v1037 = vpack.c.b16 %v757, %v753
    %v1038 = vpack.c.b16 %v758, %v754
    %v1039 = vpack.c.b16 %v759, %v755
    %v1040 = vpack.c.b16 %v760, %v756
    %v1041 = vpack.c.b16 %v765, %v761
    %v1042 = vpack.c.b16 %v766, %v762
    %v1043 = vpack.c.b16 %v767, %v763
    %v1044 = vpack.c.b16 %v768, %v764
    %v1045 = vpack.c.b16 %v773, %v769
    %v1046 = vpack.c.b16 %v774, %v770
    %v1047 = vpack.c.b16 %v775, %v771
    %v1048 = vpack.c.b16 %v776, %v772
    %v1049 = vpack.c.b16 %v781, %v777
    %v1050 = vpack.c.b16 %v782, %v778
    %v1051 = vpack.c.b16 %v783, %v779
    %v1052 = vpack.c.b16 %v784, %v780
    %v1053 = vpack.c.b16 %v789, %v785
    %v1054 = vpack.c.b16 %v790, %v786
    %v1055 = vpack.c.b16 %v791, %v787
    %v1056 = vpack.c.b16 %v792, %v788
    %v1057 = vpack.c.b16 %v797, %v793
    %v1058 = vpack.c.b16 %v798, %v794
    %v1059 = vpack.c.b16 %v799, %v795
    %v1060 = vpack.c.b16 %v800, %v796
    %v1061 = vpack.c.b16 %v805, %v801
    %v1062 = vpack.c.b16 %v806, %v802
    %v1063 = vpack.c.b16 %v807, %v803
    %v1064 = vpack.c.b16 %v808, %v804
    %v1065 = vpack.c.b16 %v813, %v809
    %v1066 = vpack.c.b16 %v814, %v810
    %v1067 = vpack.c.b16 %v815, %v811
    %v1068 = vpack.c.b16 %v816, %v812
    %v1069 = vpack.c.b16 %v821, %v817
    %v1070 = vpack.c.b16 %v822, %v818
    %v1071 = vpack.c.b16 %v823, %v819
    %v1072 = vpack.c.b16 %v824, %v820
    %v1073 = vpack.c.b16 %v829, %v825
    %v1074 = vpack.c.b16 %v830, %v826
    %v1075 = vpack.c.b16 %v831, %v827
    %v1076 = vpack.c.b16 %v832, %v828
    %v1077 = vpack.c.b16 %v837, %v833
    %v1078 = vpack.c.b16 %v838, %v834
    %v1079 = vpack.c.b16 %v839, %v835
    %v1080 = vpack.c.b16 %v840, %v836
    %v1081 = vpack.c.b16 %v845, %v841
    %v1082 = vpack.c.b16 %v846, %v842
    %v1083 = vpack.c.b16 %v847, %v843
    %v1084 = vpack.c.b16 %v848, %v844
    %v1085 = vpack.c.b16 %v853, %v849
    %v1086 = vpack.c.b16 %v854, %v850
    %v1087 = vpack.c.b16 %v855, %v851
    %v1088 = vpack.c.b16 %v856, %v852
    %v1089 = vpack.c.b16 %v861, %v857
    %v1090 = vpack.c.b16 %v862, %v858
    %v1091 = vpack.c.b16 %v863, %v859
    %v1092 = vpack.c.b16 %v864, %v860
    %v1093 = vpack.c.b16 %v869, %v865
    %v1094 = vpack.c.b16 %v870, %v866
    %v1095 = vpack.c.b16 %v871, %v867
    %v1096 = vpack.c.b16 %v872, %v868
    %v1097 = vpack.c.b16 %v877, %v873
    %v1098 = vpack.c.b16 %v878, %v874
    %v1099 = vpack.c.b16 %v879, %v875
    %v1100 = vpack.c.b16 %v880, %v876
    %v1101 = vpack.c.b16 %v885, %v881
    %v1102 = vpack.c.b16 %v886, %v882
    %v1103 = vpack.c.b16 %v887, %v883
    %v1104 = vpack.c.b16 %v888, %v884
    %v1105 = vpack.c.b16 %v893, %v889
    %v1106 = vpack.c.b16 %v894, %v890
    %v1107 = vpack.c.b16 %v895, %v891
    %v1108 = vpack.c.b16 %v896, %v892
    %v1109 = vpack.c.b16 %v901, %v897
    %v1110 = vpack.c.b16 %v902, %v898
    %v1111 = vpack.c.b16 %v903, %v899
    %v1112 = vpack.c.b16 %v904, %v900
    %v1113 = vpack.c.b16 %v909, %v905
    %v1114 = vpack.c.b16 %v910, %v906
    %v1115 = vpack.c.b16 %v911, %v907
    %v1116 = vpack.c.b16 %v912, %v908
    %v1117 = vpack.c.b16 %v917, %v913
    %v1118 = vpack.c.b16 %v918, %v914
    %v1119 = vpack.c.b16 %v919, %v915
    %v1120 = vpack.c.b16 %v920, %v916
    %v1121 = vpack.c.b16 %v925, %v921
    %v1122 = vpack.c.b16 %v926, %v922
    %v1123 = vpack.c.b16 %v927, %v923
    %v1124 = vpack.c.b16 %v928, %v924
    %vm1321 = vcmask 130048
    %v1323 = vsel %vm1321, %v122, 0
    %1325 = vmatprep.subr.bf16.mxu0 %v930
    %1326 = vmatpush1.bf16.msra.mxu0 %v929
    %1327 = vmatprep.subr.bf16.mxu0 %v934
    %1328 = vmatpush1.bf16.msra.mxu0 %v933
    %1329 = vmatprep.subr.bf16.mxu0 %v938
    %1330 = vmatpush1.bf16.msra.mxu0 %v937
    %1331 = vmatprep.subr.bf16.mxu0 %v942
    %1332 = vmatpush1.bf16.msra.mxu0 %v941
    %1333 = vmatprep.subr.bf16.mxu0 %v946
    %1334 = vmatpush1.bf16.msra.mxu0 %v945
    %1335 = vmatprep.subr.bf16.mxu0 %v950
    %1336 = vmatpush1.bf16.msra.mxu0 %v949
    %1337 = vmatprep.subr.bf16.mxu0 %v954
    %1338 = vmatpush1.bf16.msra.mxu0 %v953
    %1339 = vmatprep.subr.bf16.mxu0 %v958
    %1340 = vmatpush1.bf16.msra.mxu0 %v957
    %1341 = vmatprep.subr.bf16.mxu0 %v962
    %1342 = vmatpush1.bf16.msra.mxu0 %v961
    %1343 = vmatprep.subr.bf16.mxu0 %v966
    %1344 = vmatpush1.bf16.msra.mxu0 %v965
    %1345 = vmatprep.subr.bf16.mxu0 %v970
    %1346 = vmatpush1.bf16.msra.mxu0 %v969
    %1347 = vmatprep.subr.bf16.mxu0 %v974
    %1348 = vmatpush1.bf16.msra.mxu0 %v973
    %1349 = vmatprep.subr.bf16.mxu0 %v978
    %1350 = vmatpush1.bf16.msra.mxu0 %v977
    %1351 = vmatprep.subr.bf16.mxu0 %v982
    %1352 = vmatpush1.bf16.msra.mxu0 %v981
    %1353 = vmatprep.subr.bf16.mxu0 %v986
    %1354 = vmatpush1.bf16.msra.mxu0 %v985
    %1355 = vmatprep.subr.bf16.mxu0 %v990
    %1356 = vmatpush1.bf16.msra.mxu0 %v989
    %1357 = vmatprep.mubr.bf16.mxu0 %v117
    %1358 = vmatmul.mubr.bf16.gmra.mrb[0].mxu0 %v116
    %v1359 = vpop.f32.mrb[0].mxu0
    %v1360 = vadd.f32 %v324, %v1359
    %v1361 = vpop.f32.mrb[0].mxu0
    %v1362 = vadd.f32 %v328, %v1361
    %v1363 = vpop.f32.mrb[0].mxu0
    %v1364 = vadd.f32 %v324, %v1363
    %v1365 = vpop.f32.mrb[0].mxu0
    %v1366 = vadd.f32 %v328, %v1365
    %1367 = vdwg.mxu0
    %1368 = vmatprep.subr.bf16.mxu0 %v994
    %1369 = vmatpush1.bf16.msra.mxu0 %v993
    %1370 = vmatprep.subr.bf16.mxu0 %v998
    %1371 = vmatpush1.bf16.msra.mxu0 %v997
    %1372 = vmatprep.subr.bf16.mxu0 %v1002
    %1373 = vmatpush1.bf16.msra.mxu0 %v1001
    %1374 = vmatprep.subr.bf16.mxu0 %v1006
    %1375 = vmatpush1.bf16.msra.mxu0 %v1005
    %1376 = vmatprep.subr.bf16.mxu0 %v1010
    %1377 = vmatpush1.bf16.msra.mxu0 %v1009
    %1378 = vmatprep.subr.bf16.mxu0 %v1014
    %1379 = vmatpush1.bf16.msra.mxu0 %v1013
    %1380 = vmatprep.subr.bf16.mxu0 %v1018
    %1381 = vmatpush1.bf16.msra.mxu0 %v1017
    %1382 = vmatprep.subr.bf16.mxu0 %v1022
    %1383 = vmatpush1.bf16.msra.mxu0 %v1021
    %1384 = vmatprep.subr.bf16.mxu0 %v1026
    %1385 = vmatpush1.bf16.msra.mxu0 %v1025
    %1386 = vmatprep.subr.bf16.mxu0 %v1030
    %1387 = vmatpush1.bf16.msra.mxu0 %v1029
    %1388 = vmatprep.subr.bf16.mxu0 %v1034
    %1389 = vmatpush1.bf16.msra.mxu0 %v1033
    %1390 = vmatprep.subr.bf16.mxu0 %v1038
    %1391 = vmatpush1.bf16.msra.mxu0 %v1037
    %1392 = vmatprep.subr.bf16.mxu0 %v1042
    %1393 = vmatpush1.bf16.msra.mxu0 %v1041
    %1394 = vmatprep.subr.bf16.mxu0 %v1046
    %1395 = vmatpush1.bf16.msra.mxu0 %v1045
    %1396 = vmatprep.subr.bf16.mxu0 %v1050
    %1397 = vmatpush1.bf16.msra.mxu0 %v1049
    %1398 = vmatprep.subr.bf16.mxu0 %v1054
    %1399 = vmatpush1.bf16.msra.mxu0 %v1053
    %1400 = vmatprep.mubr.bf16.mxu0 %v119
    %1401 = vmatmul.mubr.bf16.gmra.mrb[0].mxu0 %v118
    %v1402 = vpop.f32.mrb[0].mxu0
    %v1403 = vadd.f32 %v1360, %v1402
    %v1404 = vpop.f32.mrb[0].mxu0
    %v1405 = vadd.f32 %v1362, %v1404
    %v1406 = vpop.f32.mrb[0].mxu0
    %v1407 = vadd.f32 %v1364, %v1406
    %v1408 = vpop.f32.mrb[0].mxu0
    %v1409 = vadd.f32 %v1366, %v1408
    %1410 = vdwg.mxu0
    %1411 = vmatprep.subr.bf16.mxu0 %v1058
    %1412 = vmatpush1.bf16.msra.mxu0 %v1057
    %1413 = vmatprep.subr.bf16.mxu0 %v1062
    %1414 = vmatpush1.bf16.msra.mxu0 %v1061
    %1415 = vmatprep.subr.bf16.mxu0 %v1066
    %1416 = vmatpush1.bf16.msra.mxu0 %v1065
    %1417 = vmatprep.subr.bf16.mxu0 %v1070
    %1418 = vmatpush1.bf16.msra.mxu0 %v1069
    %1419 = vmatprep.subr.bf16.mxu0 %v1074
    %1420 = vmatpush1.bf16.msra.mxu0 %v1073
    %1421 = vmatprep.subr.bf16.mxu0 %v1078
    %1422 = vmatpush1.bf16.msra.mxu0 %v1077
    %1423 = vmatprep.subr.bf16.mxu0 %v1082
    %1424 = vmatpush1.bf16.msra.mxu0 %v1081
    %1425 = vmatprep.subr.bf16.mxu0 %v1086
    %1426 = vmatpush1.bf16.msra.mxu0 %v1085
    %1427 = vmatprep.subr.bf16.mxu0 %v1090
    %1428 = vmatpush1.bf16.msra.mxu0 %v1089
    %1429 = vmatprep.subr.bf16.mxu0 %v1094
    %1430 = vmatpush1.bf16.msra.mxu0 %v1093
    %1431 = vmatprep.subr.bf16.mxu0 %v1098
    %1432 = vmatpush1.bf16.msra.mxu0 %v1097
    %1433 = vmatprep.subr.bf16.mxu0 %v1102
    %1434 = vmatpush1.bf16.msra.mxu0 %v1101
    %1435 = vmatprep.subr.bf16.mxu0 %v1106
    %1436 = vmatpush1.bf16.msra.mxu0 %v1105
    %1437 = vmatprep.subr.bf16.mxu0 %v1110
    %1438 = vmatpush1.bf16.msra.mxu0 %v1109
    %1439 = vmatprep.subr.bf16.mxu0 %v1114
    %1440 = vmatpush1.bf16.msra.mxu0 %v1113
    %1441 = vmatprep.subr.bf16.mxu0 %v1118
    %1442 = vmatpush1.bf16.msra.mxu0 %v1117
    %1443 = vmatprep.mubr.bf16.mxu0 %v121
    %1444 = vmatmul.mubr.bf16.gmra.mrb[0].mxu0 %v120
    %v1445 = vpop.f32.mrb[0].mxu0
    %v1446 = vadd.f32 %v1403, %v1445
    %v1447 = vpop.f32.mrb[0].mxu0
    %v1448 = vadd.f32 %v1405, %v1447
    %v1449 = vpop.f32.mrb[0].mxu0
    %v1450 = vadd.f32 %v1407, %v1449
    %v1451 = vpop.f32.mrb[0].mxu0
    %v1452 = vadd.f32 %v1409, %v1451
    %1453 = vdwg.mxu0
    %1454 = vmatprep.subr.bf16.mxu0 %v1122
    %1455 = vmatpush1.bf16.msra.mxu0 %v1121
    %1456 = vmatprep.subr.bf16.mxu0 0
    %1457 = vmatpush1.bf16.msra.mxu0 0
    %1458 = vmatprep.subr.bf16.mxu0 0
    %1459 = vmatpush1.bf16.msra.mxu0 0
    %1460 = vmatprep.subr.bf16.mxu0 0
    %1461 = vmatpush1.bf16.msra.mxu0 0
    %1462 = vmatprep.subr.bf16.mxu0 0
    %1463 = vmatpush1.bf16.msra.mxu0 0
    %1464 = vmatprep.subr.bf16.mxu0 0
    %1465 = vmatpush1.bf16.msra.mxu0 0
    %1466 = vmatprep.subr.bf16.mxu0 0
    %1467 = vmatpush1.bf16.msra.mxu0 0
    %1468 = vmatprep.subr.bf16.mxu0 0
    %1469 = vmatpush1.bf16.msra.mxu0 0
    %1470 = vmatprep.subr.bf16.mxu0 0
    %1471 = vmatpush1.bf16.msra.mxu0 0
    %1472 = vmatprep.subr.bf16.mxu0 0
    %1473 = vmatpush1.bf16.msra.mxu0 0
    %1474 = vmatprep.subr.bf16.mxu0 0
    %1475 = vmatpush1.bf16.msra.mxu0 0
    %1476 = vmatprep.subr.bf16.mxu0 0
    %1477 = vmatpush1.bf16.msra.mxu0 0
    %1478 = vmatprep.subr.bf16.mxu0 0
    %1479 = vmatpush1.bf16.msra.mxu0 0
    %1480 = vmatprep.subr.bf16.mxu0 0
    %1481 = vmatpush1.bf16.msra.mxu0 0
    %1482 = vmatprep.subr.bf16.mxu0 0
    %1483 = vmatpush1.bf16.msra.mxu0 0
    %1484 = vmatprep.subr.bf16.mxu0 0
    %1485 = vmatpush1.bf16.msra.mxu0 0
    %1486 = vmatprep.mubr.bf16.mxu0 0
    %1487 = vmatmul.mubr.bf16.gmra.mrb[0].mxu0 %v1323
    %v1488 = vpop.f32.mrb[0].mxu0
    %v1489 = vadd.f32 %v1446, %v1488
    %v1490 = vpop.f32.mrb[0].mxu0
    %v1491 = vadd.f32 %v1448, %v1490
    %v1492 = vpop.f32.mrb[0].mxu0
    %v1493 = vadd.f32 %v1450, %v1492
    %v1494 = vpop.f32.mrb[0].mxu0
    %v1495 = vadd.f32 %v1452, %v1494
    %1496 = vdwg.mxu0
    %1497 = vmatprep.subr.bf16.mxu0 %v932
    %1498 = vmatpush1.bf16.msra.mxu0 %v931
    %1499 = vmatprep.subr.bf16.mxu0 %v936
    %1500 = vmatpush1.bf16.msra.mxu0 %v935
    %1501 = vmatprep.subr.bf16.mxu0 %v940
    %1502 = vmatpush1.bf16.msra.mxu0 %v939
    %1503 = vmatprep.subr.bf16.mxu0 %v944
    %1504 = vmatpush1.bf16.msra.mxu0 %v943
    %1505 = vmatprep.subr.bf16.mxu0 %v948
    %1506 = vmatpush1.bf16.msra.mxu0 %v947
    %1507 = vmatprep.subr.bf16.mxu0 %v952
    %1508 = vmatpush1.bf16.msra.mxu0 %v951
    %1509 = vmatprep.subr.bf16.mxu0 %v956
    %1510 = vmatpush1.bf16.msra.mxu0 %v955
    %1511 = vmatprep.subr.bf16.mxu0 %v960
    %1512 = vmatpush1.bf16.msra.mxu0 %v959
    %1513 = vmatprep.subr.bf16.mxu0 %v964
    %1514 = vmatpush1.bf16.msra.mxu0 %v963
    %1515 = vmatprep.subr.bf16.mxu0 %v968
    %1516 = vmatpush1.bf16.msra.mxu0 %v967
    %1517 = vmatprep.subr.bf16.mxu0 %v972
    %1518 = vmatpush1.bf16.msra.mxu0 %v971
    %1519 = vmatprep.subr.bf16.mxu0 %v976
    %1520 = vmatpush1.bf16.msra.mxu0 %v975
    %1521 = vmatprep.subr.bf16.mxu0 %v980
    %1522 = vmatpush1.bf16.msra.mxu0 %v979
    %1523 = vmatprep.subr.bf16.mxu0 %v984
    %1524 = vmatpush1.bf16.msra.mxu0 %v983
    %1525 = vmatprep.subr.bf16.mxu0 %v988
    %1526 = vmatpush1.bf16.msra.mxu0 %v987
    %1527 = vmatprep.subr.bf16.mxu0 %v992
    %1528 = vmatpush1.bf16.msra.mxu0 %v991
    %1529 = vmatprep.mubr.bf16.mxu0 %v117
    %1530 = vmatmul.mubr.bf16.gmra.mrb[0].mxu0 %v116
    %v1531 = vpop.f32.mrb[0].mxu0
    %v1532 = vadd.f32 %v332, %v1531
    %v1533 = vpop.f32.mrb[0].mxu0
    %v1534 = vadd.f32 %v336, %v1533
    %v1535 = vpop.f32.mrb[0].mxu0
    %v1536 = vadd.f32 %v332, %v1535
    %v1537 = vpop.f32.mrb[0].mxu0
    %v1538 = vadd.f32 %v336, %v1537
    %1539 = vdwg.mxu0
    %1540 = vmatprep.subr.bf16.mxu0 %v996
    %1541 = vmatpush1.bf16.msra.mxu0 %v995
    %1542 = vmatprep.subr.bf16.mxu0 %v1000
    %1543 = vmatpush1.bf16.msra.mxu0 %v999
    %1544 = vmatprep.subr.bf16.mxu0 %v1004
    %1545 = vmatpush1.bf16.msra.mxu0 %v1003
    %1546 = vmatprep.subr.bf16.mxu0 %v1008
    %1547 = vmatpush1.bf16.msra.mxu0 %v1007
    %1548 = vmatprep.subr.bf16.mxu0 %v1012
    %1549 = vmatpush1.bf16.msra.mxu0 %v1011
    %1550 = vmatprep.subr.bf16.mxu0 %v1016
    %1551 = vmatpush1.bf16.msra.mxu0 %v1015
    %1552 = vmatprep.subr.bf16.mxu0 %v1020
    %1553 = vmatpush1.bf16.msra.mxu0 %v1019
    %1554 = vmatprep.subr.bf16.mxu0 %v1024
    %1555 = vmatpush1.bf16.msra.mxu0 %v1023
    %1556 = vmatprep.subr.bf16.mxu0 %v1028
    %1557 = vmatpush1.bf16.msra.mxu0 %v1027
    %1558 = vmatprep.subr.bf16.mxu0 %v1032
    %1559 = vmatpush1.bf16.msra.mxu0 %v1031
    %1560 = vmatprep.subr.bf16.mxu0 %v1036
    %1561 = vmatpush1.bf16.msra.mxu0 %v1035
    %1562 = vmatprep.subr.bf16.mxu0 %v1040
    %1563 = vmatpush1.bf16.msra.mxu0 %v1039
    %1564 = vmatprep.subr.bf16.mxu0 %v1044
    %1565 = vmatpush1.bf16.msra.mxu0 %v1043
    %1566 = vmatprep.subr.bf16.mxu0 %v1048
    %1567 = vmatpush1.bf16.msra.mxu0 %v1047
    %1568 = vmatprep.subr.bf16.mxu0 %v1052
    %1569 = vmatpush1.bf16.msra.mxu0 %v1051
    %1570 = vmatprep.subr.bf16.mxu0 %v1056
    %1571 = vmatpush1.bf16.msra.mxu0 %v1055
    %1572 = vmatprep.mubr.bf16.mxu0 %v119
    %1573 = vmatmul.mubr.bf16.gmra.mrb[0].mxu0 %v118
    %v1574 = vpop.f32.mrb[0].mxu0
    %v1575 = vadd.f32 %v1532, %v1574
    %v1576 = vpop.f32.mrb[0].mxu0
    %v1577 = vadd.f32 %v1534, %v1576
    %v1578 = vpop.f32.mrb[0].mxu0
    %v1579 = vadd.f32 %v1536, %v1578
    %v1580 = vpop.f32.mrb[0].mxu0
    %v1581 = vadd.f32 %v1538, %v1580
    %1582 = vdwg.mxu0
    %1583 = vmatprep.subr.bf16.mxu0 %v1060
    %1584 = vmatpush1.bf16.msra.mxu0 %v1059
    %1585 = vmatprep.subr.bf16.mxu0 %v1064
    %1586 = vmatpush1.bf16.msra.mxu0 %v1063
    %1587 = vmatprep.subr.bf16.mxu0 %v1068
    %1588 = vmatpush1.bf16.msra.mxu0 %v1067
    %1589 = vmatprep.subr.bf16.mxu0 %v1072
    %1590 = vmatpush1.bf16.msra.mxu0 %v1071
    %1591 = vmatprep.subr.bf16.mxu0 %v1076
    %1592 = vmatpush1.bf16.msra.mxu0 %v1075
    %1593 = vmatprep.subr.bf16.mxu0 %v1080
    %1594 = vmatpush1.bf16.msra.mxu0 %v1079
    %1595 = vmatprep.subr.bf16.mxu0 %v1084
    %1596 = vmatpush1.bf16.msra.mxu0 %v1083
    %1597 = vmatprep.subr.bf16.mxu0 %v1088
    %1598 = vmatpush1.bf16.msra.mxu0 %v1087
    %1599 = vmatprep.subr.bf16.mxu0 %v1092
    %1600 = vmatpush1.bf16.msra.mxu0 %v1091
    %1601 = vmatprep.subr.bf16.mxu0 %v1096
    %1602 = vmatpush1.bf16.msra.mxu0 %v1095
    %1603 = vmatprep.subr.bf16.mxu0 %v1100
    %1604 = vmatpush1.bf16.msra.mxu0 %v1099
    %1605 = vmatprep.subr.bf16.mxu0 %v1104
    %1606 = vmatpush1.bf16.msra.mxu0 %v1103
    %1607 = vmatprep.subr.bf16.mxu0 %v1108
    %1608 = vmatpush1.bf16.msra.mxu0 %v1107
    %1609 = vmatprep.subr.bf16.mxu0 %v1112
    %1610 = vmatpush1.bf16.msra.mxu0 %v1111
    %1611 = vmatprep.subr.bf16.mxu0 %v1116
    %1612 = vmatpush1.bf16.msra.mxu0 %v1115
    %1613 = vmatprep.subr.bf16.mxu0 %v1120
    %1614 = vmatpush1.bf16.msra.mxu0 %v1119
    %1615 = vmatprep.mubr.bf16.mxu0 %v121
    %1616 = vmatmul.mubr.bf16.gmra.mrb[0].mxu0 %v120
    %v1617 = vpop.f32.mrb[0].mxu0
    %v1618 = vadd.f32 %v1575, %v1617
    %v1619 = vpop.f32.mrb[0].mxu0
    %v1620 = vadd.f32 %v1577, %v1619
    %v1621 = vpop.f32.mrb[0].mxu0
    %v1622 = vadd.f32 %v1579, %v1621
    %v1623 = vpop.f32.mrb[0].mxu0
    %v1624 = vadd.f32 %v1581, %v1623
    %1625 = vdwg.mxu0
    %1626 = vmatprep.subr.bf16.mxu0 %v1124
    %1627 = vmatpush1.bf16.msra.mxu0 %v1123
    %1628 = vmatprep.subr.bf16.mxu0 0
    %1629 = vmatpush1.bf16.msra.mxu0 0
    %1630 = vmatprep.subr.bf16.mxu0 0
    %1631 = vmatpush1.bf16.msra.mxu0 0
    %1632 = vmatprep.subr.bf16.mxu0 0
    %1633 = vmatpush1.bf16.msra.mxu0 0
    %1634 = vmatprep.subr.bf16.mxu0 0
    %1635 = vmatpush1.bf16.msra.mxu0 0
    %1636 = vmatprep.subr.bf16.mxu0 0
    %1637 = vmatpush1.bf16.msra.mxu0 0
    %1638 = vmatprep.subr.bf16.mxu0 0
    %1639 = vmatpush1.bf16.msra.mxu0 0
    %1640 = vmatprep.subr.bf16.mxu0 0
    %1641 = vmatpush1.bf16.msra.mxu0 0
    %1642 = vmatprep.subr.bf16.mxu0 0
    %1643 = vmatpush1.bf16.msra.mxu0 0
    %1644 = vmatprep.subr.bf16.mxu0 0
    %1645 = vmatpush1.bf16.msra.mxu0 0
    %1646 = vmatprep.subr.bf16.mxu0 0
    %1647 = vmatpush1.bf16.msra.mxu0 0
    %1648 = vmatprep.subr.bf16.mxu0 0
    %1649 = vmatpush1.bf16.msra.mxu0 0
    %1650 = vmatprep.subr.bf16.mxu0 0
    %1651 = vmatpush1.bf16.msra.mxu0 0
    %1652 = vmatprep.subr.bf16.mxu0 0
    %1653 = vmatpush1.bf16.msra.mxu0 0
    %1654 = vmatprep.subr.bf16.mxu0 0
    %1655 = vmatpush1.bf16.msra.mxu0 0
    %1656 = vmatprep.subr.bf16.mxu0 0
    %1657 = vmatpush1.bf16.msra.mxu0 0
    %1658 = vmatprep.mubr.bf16.mxu0 0
    %1659 = vmatmul.mubr.bf16.gmra.mrb[0].mxu0 %v1323
    %v1660 = vpop.f32.mrb[0].mxu0
    %v1661 = vadd.f32 %v1618, %v1660
    %v1662 = vpop.f32.mrb[0].mxu0
    %v1663 = vadd.f32 %v1620, %v1662
    %v1664 = vpop.f32.mrb[0].mxu0
    %v1665 = vadd.f32 %v1622, %v1664
    %v1666 = vpop.f32.mrb[0].mxu0
    %v1667 = vadd.f32 %v1624, %v1666
    %1668 = vdwg.mxu0
    %v1669 = vmax.f32 %v1489, 0.0
    %v1670 = vmax.f32 %v1491, 0.0
    %v1671 = vmax.f32 %v1661, 0.0
    %v1672 = vmax.f32 %v1663, 0.0
    %v1673 = vmax.f32 %v1493, 0.0
    %v1674 = vmax.f32 %v1495, 0.0
    %v1675 = vmax.f32 %v1665, 0.0
    %v1676 = vmax.f32 %v1667, 0.0
    %v1677 = vpack.c.bf16 %v1673, %v1669
    %v1678 = vpack.c.bf16 %v1674, %v1670
    %v1679 = vpack.c.bf16 %v1675, %v1671
    %v1680 = vpack.c.bf16 %v1676, %v1672
    %v1681 = vld [vmem:[#allocation7] sm:$0xff]
    %v1682 = vld [vmem:[#allocation7 + $0x8] sm:$0xff]
    %v1683 = vld [vmem:[#allocation7 + $0x10] sm:$0xff]
    %v1684 = vld [vmem:[#allocation7 + $0x18] sm:$0xff]
    %v1685 = vld [vmem:[#allocation7 + $0x20] sm:$0xff]
    %v1686 = vld [vmem:[#allocation7 + $0x28] sm:$0xff]
    %v1687 = vld [vmem:[#allocation7 + $0x30] sm:$0xff]
    %v1688 = vld [vmem:[#allocation7 + $0x38] sm:$0xff]
    %v1689 = vld [vmem:[#allocation7 + $0x40] sm:$0xff]
    %v1690 = vld [vmem:[#allocation7 + $0x48] sm:$0xff]
    %v1691 = vld [vmem:[#allocation7 + $0x50] sm:$0xff]
    %v1692 = vld [vmem:[#allocation7 + $0x58] sm:$0xff]
    %v1693 = vld [vmem:[#allocation7 + $0x60] sm:$0xff]
    %v1694 = vld [vmem:[#allocation7 + $0x68] sm:$0xff]
    %v1695 = vld [vmem:[#allocation7 + $0x70] sm:$0xff]
    %v1696 = vld [vmem:[#allocation7 + $0x78] sm:$0xff]
    %v1697 = vld [vmem:[#allocation7 + $0x80] sm:$0xff]
    %v1698 = vld [vmem:[#allocation7 + $0x88] sm:$0xff]
    %v1699 = vld [vmem:[#allocation7 + $0x90] sm:$0xff]
    %v1700 = vld [vmem:[#allocation7 + $0x98] sm:$0xff]
    %v1701 = vld [vmem:[#allocation7 + $0xa0] sm:$0xff]
    %v1702 = vld [vmem:[#allocation7 + $0xa8] sm:$0xff]
    %v1703 = vld [vmem:[#allocation7 + $0xb0] sm:$0xff]
    %v1704 = vld [vmem:[#allocation7 + $0xb8] sm:$0xff]
    %v1705 = vld [vmem:[#allocation7 + $0xc0] sm:$0xff]
    %v1706 = vld [vmem:[#allocation7 + $0xc8] sm:$0xff]
    %v1707 = vld [vmem:[#allocation7 + $0xd0] sm:$0xff]
    %v1708 = vld [vmem:[#allocation7 + $0xd8] sm:$0xff]
    %v1709 = vld [vmem:[#allocation7 + $0xe0] sm:$0xff]
    %v1710 = vld [vmem:[#allocation7 + $0xe8] sm:$0xff]
    %v1711 = vld [vmem:[#allocation7 + $0xf0] sm:$0xff]
    %v1712 = vld [vmem:[#allocation7 + $0xf8] sm:$0xff]
    %v1713 = vld [vmem:[#allocation7 + $0x100] sm:$0xff]
    %v1714 = vld [vmem:[#allocation7 + $0x108] sm:$0xff]
    %v1715 = vld [vmem:[#allocation7 + $0x110] sm:$0xff]
    %v1716 = vld [vmem:[#allocation7 + $0x118] sm:$0xff]
    %v1717 = vld [vmem:[#allocation7 + $0x120] sm:$0xff]
    %v1718 = vld [vmem:[#allocation7 + $0x128] sm:$0xff]
    %v1719 = vld [vmem:[#allocation7 + $0x130] sm:$0xff]
    %v1720 = vld [vmem:[#allocation7 + $0x138] sm:$0xff]
    %v1721 = vld [vmem:[#allocation7 + $0x140] sm:$0xff]
    %v1722 = vld [vmem:[#allocation7 + $0x148] sm:$0xff]
    %v1723 = vld [vmem:[#allocation7 + $0x150] sm:$0xff]
    %v1724 = vld [vmem:[#allocation7 + $0x158] sm:$0xff]
    %v1725 = vld [vmem:[#allocation7 + $0x160] sm:$0xff]
    %v1726 = vld [vmem:[#allocation7 + $0x168] sm:$0xff]
    %v1727 = vld [vmem:[#allocation7 + $0x170] sm:$0xff]
    %v1728 = vld [vmem:[#allocation7 + $0x178] sm:$0xff]
    %v1729 = vld [vmem:[#allocation7 + $0x180] sm:$0xff]
    %v1730 = vld [vmem:[#allocation7 + $0x188] sm:$0xff]
    %v1731 = vld [vmem:[#allocation7 + $0x190] sm:$0xff]
    %v1732 = vld [vmem:[#allocation7 + $0x198] sm:$0xff]
    %v1733 = vld [vmem:[#allocation7 + $0x1a0] sm:$0xff]
    %v1734 = vld [vmem:[#allocation7 + $0x1a8] sm:$0xff]
    %v1735 = vld [vmem:[#allocation7 + $0x1b0] sm:$0xff]
    %v1736 = vld [vmem:[#allocation7 + $0x1b8] sm:$0xff]
    %v1737 = vld [vmem:[#allocation7 + $0x1c0] sm:$0xff]
    %v1738 = vld [vmem:[#allocation7 + $0x1c8] sm:$0xff]
    %v1739 = vld [vmem:[#allocation7 + $0x1d0] sm:$0xff]
    %v1740 = vld [vmem:[#allocation7 + $0x1d8] sm:$0xff]
    %v1741 = vld [vmem:[#allocation7 + $0x1e0] sm:$0xff]
    %v1742 = vld [vmem:[#allocation7 + $0x1e8] sm:$0xff]
    %v1743 = vld [vmem:[#allocation7 + $0x1f0] sm:$0xff]
    %v1744 = vld [vmem:[#allocation7 + $0x1f8] sm:$0xff]
    %v1745 = vld [vmem:[#allocation7 + $0x200] sm:$0xff]
    %v1746 = vld [vmem:[#allocation7 + $0x208] sm:$0xff]
    %v1747 = vld [vmem:[#allocation7 + $0x210] sm:$0xff]
    %v1748 = vld [vmem:[#allocation7 + $0x218] sm:$0xff]
    %v1749 = vld [vmem:[#allocation7 + $0x220] sm:$0xff]
    %v1750 = vld [vmem:[#allocation7 + $0x228] sm:$0xff]
    %v1751 = vld [vmem:[#allocation7 + $0x230] sm:$0xff]
    %v1752 = vld [vmem:[#allocation7 + $0x238] sm:$0xff]
    %v1753 = vld [vmem:[#allocation7 + $0x240] sm:$0xff]
    %v1754 = vld [vmem:[#allocation7 + $0x248] sm:$0xff]
    %v1755 = vld [vmem:[#allocation7 + $0x250] sm:$0xff]
    %v1756 = vld [vmem:[#allocation7 + $0x258] sm:$0xff]
    %v1757 = vld [vmem:[#allocation7 + $0x260] sm:$0xff]
    %v1758 = vld [vmem:[#allocation7 + $0x268] sm:$0xff]
    %v1759 = vld [vmem:[#allocation7 + $0x270] sm:$0xff]
    %v1760 = vld [vmem:[#allocation7 + $0x278] sm:$0xff]
    %v1761 = vld [vmem:[#allocation7 + $0x280] sm:$0xff]
    %v1762 = vld [vmem:[#allocation7 + $0x288] sm:$0xff]
    %v1763 = vld [vmem:[#allocation7 + $0x290] sm:$0xff]
    %v1764 = vld [vmem:[#allocation7 + $0x298] sm:$0xff]
    %v1765 = vld [vmem:[#allocation7 + $0x2a0] sm:$0xff]
    %v1766 = vld [vmem:[#allocation7 + $0x2a8] sm:$0xff]
    %v1767 = vld [vmem:[#allocation7 + $0x2b0] sm:$0xff]
    %v1768 = vld [vmem:[#allocation7 + $0x2b8] sm:$0xff]
    %v1769 = vld [vmem:[#allocation7 + $0x2c0] sm:$0xff]
    %v1770 = vld [vmem:[#allocation7 + $0x2c8] sm:$0xff]
    %v1771 = vld [vmem:[#allocation7 + $0x2d0] sm:$0xff]
    %v1772 = vld [vmem:[#allocation7 + $0x2d8] sm:$0xff]
    %v1773 = vld [vmem:[#allocation7 + $0x2e0] sm:$0xff]
    %v1774 = vld [vmem:[#allocation7 + $0x2e8] sm:$0xff]
    %v1775 = vld [vmem:[#allocation7 + $0x2f0] sm:$0xff]
    %v1776 = vld [vmem:[#allocation7 + $0x2f8] sm:$0xff]
    %v1777 = vld [vmem:[#allocation7 + $0x300] sm:$0xff]
    %v1778 = vld [vmem:[#allocation7 + $0x308] sm:$0xff]
    %v1779 = vld [vmem:[#allocation7 + $0x310] sm:$0xff]
    %v1780 = vld [vmem:[#allocation7 + $0x318] sm:$0xff]
    %v1781 = vld [vmem:[#allocation7 + $0x320] sm:$0xff]
    %v1782 = vld [vmem:[#allocation7 + $0x328] sm:$0xff]
    %v1783 = vld [vmem:[#allocation7 + $0x330] sm:$0xff]
    %v1784 = vld [vmem:[#allocation7 + $0x338] sm:$0xff]
    %v1785 = vld [vmem:[#allocation7 + $0x340] sm:$0xff]
    %v1786 = vld [vmem:[#allocation7 + $0x348] sm:$0xff]
    %v1787 = vld [vmem:[#allocation7 + $0x350] sm:$0xff]
    %v1788 = vld [vmem:[#allocation7 + $0x358] sm:$0xff]
    %v1789 = vld [vmem:[#allocation7 + $0x360] sm:$0xff]
    %v1790 = vld [vmem:[#allocation7 + $0x368] sm:$0xff]
    %v1791 = vld [vmem:[#allocation7 + $0x370] sm:$0xff]
    %v1792 = vld [vmem:[#allocation7 + $0x378] sm:$0xff]
    %v1793 = vld [vmem:[#allocation7 + $0x380] sm:$0xff]
    %v1794 = vld [vmem:[#allocation7 + $0x388] sm:$0xff]
    %v1795 = vld [vmem:[#allocation7 + $0x390] sm:$0xff]
    %v1796 = vld [vmem:[#allocation7 + $0x398] sm:$0xff]
    %v1797 = vld [vmem:[#allocation7 + $0x3a0] sm:$0xff]
    %v1798 = vld [vmem:[#allocation7 + $0x3a8] sm:$0xff]
    %v1799 = vld [vmem:[#allocation7 + $0x3b0] sm:$0xff]
    %v1800 = vld [vmem:[#allocation7 + $0x3b8] sm:$0xff]
    %v1801 = vld [vmem:[#allocation7 + $0x3c0] sm:$0xff]
    %v1802 = vld [vmem:[#allocation7 + $0x3c8] sm:$0xff]
    %v1803 = vld [vmem:[#allocation7 + $0x3d0] sm:$0xff]
    %v1804 = vld [vmem:[#allocation7 + $0x3d8] sm:$0xff]
    %v1805 = vld [vmem:[#allocation7 + $0x3e0] sm:$0xff]
    %v1806 = vld [vmem:[#allocation7 + $0x3e8] sm:$0xff]
    %v1807 = vld [vmem:[#allocation7 + $0x3f0] sm:$0xff]
    %v1808 = vld [vmem:[#allocation7 + $0x3f8] sm:$0xff]
    %v1809 = vld [vmem:[%s4] sm:$0xf]
    %v1811 = vlaneseq
    %v1812 = vshrl.u32 %v1811, 7
    %v1813 = vsub.s32 0, %v1812
    %v1814 = vrot.slane %v1809, %v1813
    %v1815 = vlaneseq
    %v1816 = vshrl.u32 %v1815, 7
    %v1817 = vsub.s32 1, %v1816
    %v1818 = vrot.slane %v1809, %v1817
    %v1819 = vlaneseq
    %v1820 = vshrl.u32 %v1819, 7
    %v1821 = vsub.s32 2, %v1820
    %v1822 = vrot.slane %v1809, %v1821
    %v1823 = vlaneseq
    %v1824 = vshrl.u32 %v1823, 7
    %v1825 = vsub.s32 3, %v1824
    %v1826 = vrot.slane %v1809, %v1825
    %v1959 = vunpack.c.l.b16 %v1681
    %v1960 = vunpack.c.h.b16 %v1681
    %v1961 = vunpack.c.l.b16 %v1682
    %v1962 = vunpack.c.h.b16 %v1682
    %v1963 = vunpack.c.l.b16 %v1683
    %v1964 = vunpack.c.h.b16 %v1683
    %v1965 = vunpack.c.l.b16 %v1684
    %v1966 = vunpack.c.h.b16 %v1684
    %v1967 = vunpack.c.l.b16 %v1685
    %v1968 = vunpack.c.h.b16 %v1685
    %v1969 = vunpack.c.l.b16 %v1686
    %v1970 = vunpack.c.h.b16 %v1686
    %v1971 = vunpack.c.l.b16 %v1687
    %v1972 = vunpack.c.h.b16 %v1687
    %v1973 = vunpack.c.l.b16 %v1688
    %v1974 = vunpack.c.h.b16 %v1688
    %v1975 = vunpack.c.l.b16 %v1689
    %v1976 = vunpack.c.h.b16 %v1689
    %v1977 = vunpack.c.l.b16 %v1690
    %v1978 = vunpack.c.h.b16 %v1690
    %v1979 = vunpack.c.l.b16 %v1691
    %v1980 = vunpack.c.h.b16 %v1691
    %v1981 = vunpack.c.l.b16 %v1692
    %v1982 = vunpack.c.h.b16 %v1692
    %v1983 = vunpack.c.l.b16 %v1693
    %v1984 = vunpack.c.h.b16 %v1693
    %v1985 = vunpack.c.l.b16 %v1694
    %v1986 = vunpack.c.h.b16 %v1694
    %v1987 = vunpack.c.l.b16 %v1695
    %v1988 = vunpack.c.h.b16 %v1695
    %v1989 = vunpack.c.l.b16 %v1696
    %v1990 = vunpack.c.h.b16 %v1696
    %v1991 = vunpack.c.l.b16 %v1697
    %v1992 = vunpack.c.h.b16 %v1697
    %v1993 = vunpack.c.l.b16 %v1698
    %v1994 = vunpack.c.h.b16 %v1698
    %v1995 = vunpack.c.l.b16 %v1699
    %v1996 = vunpack.c.h.b16 %v1699
    %v1997 = vunpack.c.l.b16 %v1700
    %v1998 = vunpack.c.h.b16 %v1700
    %v1999 = vunpack.c.l.b16 %v1701
    %v2000 = vunpack.c.h.b16 %v1701
    %v2001 = vunpack.c.l.b16 %v1702
    %v2002 = vunpack.c.h.b16 %v1702
    %v2003 = vunpack.c.l.b16 %v1703
    %v2004 = vunpack.c.h.b16 %v1703
    %v2005 = vunpack.c.l.b16 %v1704
    %v2006 = vunpack.c.h.b16 %v1704
    %v2007 = vunpack.c.l.b16 %v1705
    %v2008 = vunpack.c.h.b16 %v1705
    %v2009 = vunpack.c.l.b16 %v1706
    %v2010 = vunpack.c.h.b16 %v1706
    %v2011 = vunpack.c.l.b16 %v1707
    %v2012 = vunpack.c.h.b16 %v1707
    %v2013 = vunpack.c.l.b16 %v1708
    %v2014 = vunpack.c.h.b16 %v1708
    %v2015 = vunpack.c.l.b16 %v1709
    %v2016 = vunpack.c.h.b16 %v1709
    %v2017 = vunpack.c.l.b16 %v1710
    %v2018 = vunpack.c.h.b16 %v1710
    %v2019 = vunpack.c.l.b16 %v1711
    %v2020 = vunpack.c.h.b16 %v1711
    %v2021 = vunpack.c.l.b16 %v1712
    %v2022 = vunpack.c.h.b16 %v1712
    %v2023 = vunpack.c.l.b16 %v1713
    %v2024 = vunpack.c.h.b16 %v1713
    %v2025 = vunpack.c.l.b16 %v1714
    %v2026 = vunpack.c.h.b16 %v1714
    %v2027 = vunpack.c.l.b16 %v1715
    %v2028 = vunpack.c.h.b16 %v1715
    %v2029 = vunpack.c.l.b16 %v1716
    %v2030 = vunpack.c.h.b16 %v1716
    %v2031 = vunpack.c.l.b16 %v1717
    %v2032 = vunpack.c.h.b16 %v1717
    %v2033 = vunpack.c.l.b16 %v1718
    %v2034 = vunpack.c.h.b16 %v1718
    %v2035 = vunpack.c.l.b16 %v1719
    %v2036 = vunpack.c.h.b16 %v1719
    %v2037 = vunpack.c.l.b16 %v1720
    %v2038 = vunpack.c.h.b16 %v1720
    %v2039 = vunpack.c.l.b16 %v1721
    %v2040 = vunpack.c.h.b16 %v1721
    %v2041 = vunpack.c.l.b16 %v1722
    %v2042 = vunpack.c.h.b16 %v1722
    %v2043 = vunpack.c.l.b16 %v1723
    %v2044 = vunpack.c.h.b16 %v1723
    %v2045 = vunpack.c.l.b16 %v1724
    %v2046 = vunpack.c.h.b16 %v1724
    %v2047 = vunpack.c.l.b16 %v1725
    %v2048 = vunpack.c.h.b16 %v1725
    %v2049 = vunpack.c.l.b16 %v1726
    %v2050 = vunpack.c.h.b16 %v1726
    %v2051 = vunpack.c.l.b16 %v1727
    %v2052 = vunpack.c.h.b16 %v1727
    %v2053 = vunpack.c.l.b16 %v1728
    %v2054 = vunpack.c.h.b16 %v1728
    %v2055 = vunpack.c.l.b16 %v1729
    %v2056 = vunpack.c.h.b16 %v1729
    %v2057 = vunpack.c.l.b16 %v1730
    %v2058 = vunpack.c.h.b16 %v1730
    %v2059 = vunpack.c.l.b16 %v1731
    %v2060 = vunpack.c.h.b16 %v1731
    %v2061 = vunpack.c.l.b16 %v1732
    %v2062 = vunpack.c.h.b16 %v1732
    %v2063 = vunpack.c.l.b16 %v1733
    %v2064 = vunpack.c.h.b16 %v1733
    %v2065 = vunpack.c.l.b16 %v1734
    %v2066 = vunpack.c.h.b16 %v1734
    %v2067 = vunpack.c.l.b16 %v1735
    %v2068 = vunpack.c.h.b16 %v1735
    %v2069 = vunpack.c.l.b16 %v1736
    %v2070 = vunpack.c.h.b16 %v1736
    %v2071 = vunpack.c.l.b16 %v1737
    %v2072 = vunpack.c.h.b16 %v1737
    %v2073 = vunpack.c.l.b16 %v1738
    %v2074 = vunpack.c.h.b16 %v1738
    %v2075 = vunpack.c.l.b16 %v1739
    %v2076 = vunpack.c.h.b16 %v1739
    %v2077 = vunpack.c.l.b16 %v1740
    %v2078 = vunpack.c.h.b16 %v1740
    %v2079 = vunpack.c.l.b16 %v1741
    %v2080 = vunpack.c.h.b16 %v1741
    %v2081 = vunpack.c.l.b16 %v1742
    %v2082 = vunpack.c.h.b16 %v1742
    %v2083 = vunpack.c.l.b16 %v1743
    %v2084 = vunpack.c.h.b16 %v1743
    %v2085 = vunpack.c.l.b16 %v1744
    %v2086 = vunpack.c.h.b16 %v1744
    %v2087 = vunpack.c.l.b16 %v1745
    %v2088 = vunpack.c.h.b16 %v1745
    %v2089 = vunpack.c.l.b16 %v1746
    %v2090 = vunpack.c.h.b16 %v1746
    %v2091 = vunpack.c.l.b16 %v1747
    %v2092 = vunpack.c.h.b16 %v1747
    %v2093 = vunpack.c.l.b16 %v1748
    %v2094 = vunpack.c.h.b16 %v1748
    %v2095 = vunpack.c.l.b16 %v1749
    %v2096 = vunpack.c.h.b16 %v1749
    %v2097 = vunpack.c.l.b16 %v1750
    %v2098 = vunpack.c.h.b16 %v1750
    %v2099 = vunpack.c.l.b16 %v1751
    %v2100 = vunpack.c.h.b16 %v1751
    %v2101 = vunpack.c.l.b16 %v1752
    %v2102 = vunpack.c.h.b16 %v1752
    %v2103 = vunpack.c.l.b16 %v1753
    %v2104 = vunpack.c.h.b16 %v1753
    %v2105 = vunpack.c.l.b16 %v1754
    %v2106 = vunpack.c.h.b16 %v1754
    %v2107 = vunpack.c.l.b16 %v1755
    %v2108 = vunpack.c.h.b16 %v1755
    %v2109 = vunpack.c.l.b16 %v1756
    %v2110 = vunpack.c.h.b16 %v1756
    %v2111 = vunpack.c.l.b16 %v1757
    %v2112 = vunpack.c.h.b16 %v1757
    %v2113 = vunpack.c.l.b16 %v1758
    %v2114 = vunpack.c.h.b16 %v1758
    %v2115 = vunpack.c.l.b16 %v1759
    %v2116 = vunpack.c.h.b16 %v1759
    %v2117 = vunpack.c.l.b16 %v1760
    %v2118 = vunpack.c.h.b16 %v1760
    %v2119 = vunpack.c.l.b16 %v1761
    %v2120 = vunpack.c.h.b16 %v1761
    %v2121 = vunpack.c.l.b16 %v1762
    %v2122 = vunpack.c.h.b16 %v1762
    %v2123 = vunpack.c.l.b16 %v1763
    %v2124 = vunpack.c.h.b16 %v1763
    %v2125 = vunpack.c.l.b16 %v1764
    %v2126 = vunpack.c.h.b16 %v1764
    %v2127 = vunpack.c.l.b16 %v1765
    %v2128 = vunpack.c.h.b16 %v1765
    %v2129 = vunpack.c.l.b16 %v1766
    %v2130 = vunpack.c.h.b16 %v1766
    %v2131 = vunpack.c.l.b16 %v1767
    %v2132 = vunpack.c.h.b16 %v1767
    %v2133 = vunpack.c.l.b16 %v1768
    %v2134 = vunpack.c.h.b16 %v1768
    %v2135 = vunpack.c.l.b16 %v1769
    %v2136 = vunpack.c.h.b16 %v1769
    %v2137 = vunpack.c.l.b16 %v1770
    %v2138 = vunpack.c.h.b16 %v1770
    %v2139 = vunpack.c.l.b16 %v1771
    %v2140 = vunpack.c.h.b16 %v1771
    %v2141 = vunpack.c.l.b16 %v1772
    %v2142 = vunpack.c.h.b16 %v1772
    %v2143 = vunpack.c.l.b16 %v1773
    %v2144 = vunpack.c.h.b16 %v1773
    %v2145 = vunpack.c.l.b16 %v1774
    %v2146 = vunpack.c.h.b16 %v1774
    %v2147 = vunpack.c.l.b16 %v1775
    %v2148 = vunpack.c.h.b16 %v1775
    %v2149 = vunpack.c.l.b16 %v1776
    %v2150 = vunpack.c.h.b16 %v1776
    %v2151 = vunpack.c.l.b16 %v1777
    %v2152 = vunpack.c.h.b16 %v1777
    %v2153 = vunpack.c.l.b16 %v1778
    %v2154 = vunpack.c.h.b16 %v1778
    %v2155 = vunpack.c.l.b16 %v1779
    %v2156 = vunpack.c.h.b16 %v1779
    %v2157 = vunpack.c.l.b16 %v1780
    %v2158 = vunpack.c.h.b16 %v1780
    %v2159 = vunpack.c.l.b16 %v1781
    %v2160 = vunpack.c.h.b16 %v1781
    %v2161 = vunpack.c.l.b16 %v1782
    %v2162 = vunpack.c.h.b16 %v1782
    %v2163 = vunpack.c.l.b16 %v1783
    %v2164 = vunpack.c.h.b16 %v1783
    %v2165 = vunpack.c.l.b16 %v1784
    %v2166 = vunpack.c.h.b16 %v1784
    %v2167 = vunpack.c.l.b16 %v1785
    %v2168 = vunpack.c.h.b16 %v1785
    %v2169 = vunpack.c.l.b16 %v1786
    %v2170 = vunpack.c.h.b16 %v1786
    %v2171 = vunpack.c.l.b16 %v1787
    %v2172 = vunpack.c.h.b16 %v1787
    %v2173 = vunpack.c.l.b16 %v1788
    %v2174 = vunpack.c.h.b16 %v1788
    %v2175 = vunpack.c.l.b16 %v1789
    %v2176 = vunpack.c.h.b16 %v1789
    %v2177 = vunpack.c.l.b16 %v1790
    %v2178 = vunpack.c.h.b16 %v1790
    %v2179 = vunpack.c.l.b16 %v1791
    %v2180 = vunpack.c.h.b16 %v1791
    %v2181 = vunpack.c.l.b16 %v1792
    %v2182 = vunpack.c.h.b16 %v1792
    %v2183 = vunpack.c.l.b16 %v1793
    %v2184 = vunpack.c.h.b16 %v1793
    %v2185 = vunpack.c.l.b16 %v1794
    %v2186 = vunpack.c.h.b16 %v1794
    %v2187 = vunpack.c.l.b16 %v1795
    %v2188 = vunpack.c.h.b16 %v1795
    %v2189 = vunpack.c.l.b16 %v1796
    %v2190 = vunpack.c.h.b16 %v1796
    %v2191 = vunpack.c.l.b16 %v1797
    %v2192 = vunpack.c.h.b16 %v1797
    %v2193 = vunpack.c.l.b16 %v1798
    %v2194 = vunpack.c.h.b16 %v1798
    %v2195 = vunpack.c.l.b16 %v1799
    %v2196 = vunpack.c.h.b16 %v1799
    %v2197 = vunpack.c.l.b16 %v1800
    %v2198 = vunpack.c.h.b16 %v1800
    %v2199 = vunpack.c.l.b16 %v1801
    %v2200 = vunpack.c.h.b16 %v1801
    %v2201 = vunpack.c.l.b16 %v1802
    %v2202 = vunpack.c.h.b16 %v1802
    %v2203 = vunpack.c.l.b16 %v1803
    %v2204 = vunpack.c.h.b16 %v1803
    %v2205 = vunpack.c.l.b16 %v1804
    %v2206 = vunpack.c.h.b16 %v1804
    %v2207 = vunpack.c.l.b16 %v1805
    %v2208 = vunpack.c.h.b16 %v1805
    %v2209 = vunpack.c.l.b16 %v1806
    %v2210 = vunpack.c.h.b16 %v1806
    %v2211 = vunpack.c.l.b16 %v1807
    %v2212 = vunpack.c.h.b16 %v1807
    %v2213 = vunpack.c.l.b16 %v1808
    %v2214 = vunpack.c.h.b16 %v1808
    %v2215 = vpack.c.b16 %v1963, %v1959
    %v2216 = vpack.c.b16 %v1964, %v1960
    %v2217 = vpack.c.b16 %v1965, %v1961
    %v2218 = vpack.c.b16 %v1966, %v1962
    %v2219 = vpack.c.b16 %v1971, %v1967
    %v2220 = vpack.c.b16 %v1972, %v1968
    %v2221 = vpack.c.b16 %v1973, %v1969
    %v2222 = vpack.c.b16 %v1974, %v1970
    %v2223 = vpack.c.b16 %v1979, %v1975
    %v2224 = vpack.c.b16 %v1980, %v1976
    %v2225 = vpack.c.b16 %v1981, %v1977
    %v2226 = vpack.c.b16 %v1982, %v1978
    %v2227 = vpack.c.b16 %v1987, %v1983
    %v2228 = vpack.c.b16 %v1988, %v1984
    %v2229 = vpack.c.b16 %v1989, %v1985
    %v2230 = vpack.c.b16 %v1990, %v1986
    %v2231 = vpack.c.b16 %v1995, %v1991
    %v2232 = vpack.c.b16 %v1996, %v1992
    %v2233 = vpack.c.b16 %v1997, %v1993
    %v2234 = vpack.c.b16 %v1998, %v1994
    %v2235 = vpack.c.b16 %v2003, %v1999
    %v2236 = vpack.c.b16 %v2004, %v2000
    %v2237 = vpack.c.b16 %v2005, %v2001
    %v2238 = vpack.c.b16 %v2006, %v2002
    %v2239 = vpack.c.b16 %v2011, %v2007
    %v2240 = vpack.c.b16 %v2012, %v2008
    %v2241 = vpack.c.b16 %v2013, %v2009
    %v2242 = vpack.c.b16 %v2014, %v2010
    %v2243 = vpack.c.b16 %v2019, %v2015
    %v2244 = vpack.c.b16 %v2020, %v2016
    %v2245 = vpack.c.b16 %v2021, %v2017
    %v2246 = vpack.c.b16 %v2022, %v2018
    %v2247 = vpack.c.b16 %v2027, %v2023
    %v2248 = vpack.c.b16 %v2028, %v2024
    %v2249 = vpack.c.b16 %v2029, %v2025
    %v2250 = vpack.c.b16 %v2030, %v2026
    %v2251 = vpack.c.b16 %v2035, %v2031
    %v2252 = vpack.c.b16 %v2036, %v2032
    %v2253 = vpack.c.b16 %v2037, %v2033
    %v2254 = vpack.c.b16 %v2038, %v2034
    %v2255 = vpack.c.b16 %v2043, %v2039
    %v2256 = vpack.c.b16 %v2044, %v2040
    %v2257 = vpack.c.b16 %v2045, %v2041
    %v2258 = vpack.c.b16 %v2046, %v2042
    %v2259 = vpack.c.b16 %v2051, %v2047
    %v2260 = vpack.c.b16 %v2052, %v2048
    %v2261 = vpack.c.b16 %v2053, %v2049
    %v2262 = vpack.c.b16 %v2054, %v2050
    %v2263 = vpack.c.b16 %v2059, %v2055
    %v2264 = vpack.c.b16 %v2060, %v2056
    %v2265 = vpack.c.b16 %v2061, %v2057
    %v2266 = vpack.c.b16 %v2062, %v2058
    %v2267 = vpack.c.b16 %v2067, %v2063
    %v2268 = vpack.c.b16 %v2068, %v2064
    %v2269 = vpack.c.b16 %v2069, %v2065
    %v2270 = vpack.c.b16 %v2070, %v2066
    %v2271 = vpack.c.b16 %v2075, %v2071
    %v2272 = vpack.c.b16 %v2076, %v2072
    %v2273 = vpack.c.b16 %v2077, %v2073
    %v2274 = vpack.c.b16 %v2078, %v2074
    %v2275 = vpack.c.b16 %v2083, %v2079
    %v2276 = vpack.c.b16 %v2084, %v2080
    %v2277 = vpack.c.b16 %v2085, %v2081
    %v2278 = vpack.c.b16 %v2086, %v2082
    %v2279 = vpack.c.b16 %v2091, %v2087
    %v2280 = vpack.c.b16 %v2092, %v2088
    %v2281 = vpack.c.b16 %v2093, %v2089
    %v2282 = vpack.c.b16 %v2094, %v2090
    %v2283 = vpack.c.b16 %v2099, %v2095
    %v2284 = vpack.c.b16 %v2100, %v2096
    %v2285 = vpack.c.b16 %v2101, %v2097
    %v2286 = vpack.c.b16 %v2102, %v2098
    %v2287 = vpack.c.b16 %v2107, %v2103
    %v2288 = vpack.c.b16 %v2108, %v2104
    %v2289 = vpack.c.b16 %v2109, %v2105
    %v2290 = vpack.c.b16 %v2110, %v2106
    %v2291 = vpack.c.b16 %v2115, %v2111
    %v2292 = vpack.c.b16 %v2116, %v2112
    %v2293 = vpack.c.b16 %v2117, %v2113
    %v2294 = vpack.c.b16 %v2118, %v2114
    %v2295 = vpack.c.b16 %v2123, %v2119
    %v2296 = vpack.c.b16 %v2124, %v2120
    %v2297 = vpack.c.b16 %v2125, %v2121
    %v2298 = vpack.c.b16 %v2126, %v2122
    %v2299 = vpack.c.b16 %v2131, %v2127
    %v2300 = vpack.c.b16 %v2132, %v2128
    %v2301 = vpack.c.b16 %v2133, %v2129
    %v2302 = vpack.c.b16 %v2134, %v2130
    %v2303 = vpack.c.b16 %v2139, %v2135
    %v2304 = vpack.c.b16 %v2140, %v2136
    %v2305 = vpack.c.b16 %v2141, %v2137
    %v2306 = vpack.c.b16 %v2142, %v2138
    %v2307 = vpack.c.b16 %v2147, %v2143
    %v2308 = vpack.c.b16 %v2148, %v2144
    %v2309 = vpack.c.b16 %v2149, %v2145
    %v2310 = vpack.c.b16 %v2150, %v2146
    %v2311 = vpack.c.b16 %v2155, %v2151
    %v2312 = vpack.c.b16 %v2156, %v2152
    %v2313 = vpack.c.b16 %v2157, %v2153
    %v2314 = vpack.c.b16 %v2158, %v2154
    %v2315 = vpack.c.b16 %v2163, %v2159
    %v2316 = vpack.c.b16 %v2164, %v2160
    %v2317 = vpack.c.b16 %v2165, %v2161
    %v2318 = vpack.c.b16 %v2166, %v2162
    %v2319 = vpack.c.b16 %v2171, %v2167
    %v2320 = vpack.c.b16 %v2172, %v2168
    %v2321 = vpack.c.b16 %v2173, %v2169
    %v2322 = vpack.c.b16 %v2174, %v2170
    %v2323 = vpack.c.b16 %v2179, %v2175
    %v2324 = vpack.c.b16 %v2180, %v2176
    %v2325 = vpack.c.b16 %v2181, %v2177
    %v2326 = vpack.c.b16 %v2182, %v2178
    %v2327 = vpack.c.b16 %v2187, %v2183
    %v2328 = vpack.c.b16 %v2188, %v2184
    %v2329 = vpack.c.b16 %v2189, %v2185
    %v2330 = vpack.c.b16 %v2190, %v2186
    %v2331 = vpack.c.b16 %v2195, %v2191
    %v2332 = vpack.c.b16 %v2196, %v2192
    %v2333 = vpack.c.b16 %v2197, %v2193
    %v2334 = vpack.c.b16 %v2198, %v2194
    %v2335 = vpack.c.b16 %v2203, %v2199
    %v2336 = vpack.c.b16 %v2204, %v2200
    %v2337 = vpack.c.b16 %v2205, %v2201
    %v2338 = vpack.c.b16 %v2206, %v2202
    %v2339 = vpack.c.b16 %v2211, %v2207
    %v2340 = vpack.c.b16 %v2212, %v2208
    %v2341 = vpack.c.b16 %v2213, %v2209
    %v2342 = vpack.c.b16 %v2214, %v2210
    %2471 = vmatprep.subr.bf16.mxu0 %v2216
    %2472 = vmatpush1.bf16.msra.mxu0 %v2215
    %2473 = vmatprep.subr.bf16.mxu0 %v2220
    %2474 = vmatpush1.bf16.msra.mxu0 %v2219
    %2475 = vmatprep.subr.bf16.mxu0 %v2224
    %2476 = vmatpush1.bf16.msra.mxu0 %v2223
    %2477 = vmatprep.subr.bf16.mxu0 %v2228
    %2478 = vmatpush1.bf16.msra.mxu0 %v2227
    %2479 = vmatprep.subr.bf16.mxu0 %v2232
    %2480 = vmatpush1.bf16.msra.mxu0 %v2231
    %2481 = vmatprep.subr.bf16.mxu0 %v2236
    %2482 = vmatpush1.bf16.msra.mxu0 %v2235
    %2483 = vmatprep.subr.bf16.mxu0 %v2240
    %2484 = vmatpush1.bf16.msra.mxu0 %v2239
    %2485 = vmatprep.subr.bf16.mxu0 %v2244
    %2486 = vmatpush1.bf16.msra.mxu0 %v2243
    %2487 = vmatprep.subr.bf16.mxu0 %v2248
    %2488 = vmatpush1.bf16.msra.mxu0 %v2247
    %2489 = vmatprep.subr.bf16.mxu0 %v2252
    %2490 = vmatpush1.bf16.msra.mxu0 %v2251
    %2491 = vmatprep.subr.bf16.mxu0 %v2256
    %2492 = vmatpush1.bf16.msra.mxu0 %v2255
    %2493 = vmatprep.subr.bf16.mxu0 %v2260
    %2494 = vmatpush1.bf16.msra.mxu0 %v2259
    %2495 = vmatprep.subr.bf16.mxu0 %v2264
    %2496 = vmatpush1.bf16.msra.mxu0 %v2263
    %2497 = vmatprep.subr.bf16.mxu0 %v2268
    %2498 = vmatpush1.bf16.msra.mxu0 %v2267
    %2499 = vmatprep.subr.bf16.mxu0 %v2272
    %2500 = vmatpush1.bf16.msra.mxu0 %v2271
    %2501 = vmatprep.subr.bf16.mxu0 %v2276
    %2502 = vmatpush1.bf16.msra.mxu0 %v2275
    %2503 = vmatprep.mubr.bf16.mxu0 %v1678
    %2504 = vmatmul.mubr.bf16.gmra.mrb[0].mxu0 %v1677
    %v2505 = vpop.f32.mrb[0].mxu0
    %v2506 = vadd.f32 %v1814, %v2505
    %v2507 = vpop.f32.mrb[0].mxu0
    %v2508 = vadd.f32 %v1818, %v2507
    %v2509 = vpop.f32.mrb[0].mxu0
    %v2510 = vadd.f32 %v1814, %v2509
    %v2511 = vpop.f32.mrb[0].mxu0
    %v2512 = vadd.f32 %v1818, %v2511
    %2513 = vdwg.mxu0
    %2514 = vmatprep.subr.bf16.mxu0 %v2280
    %2515 = vmatpush1.bf16.msra.mxu0 %v2279
    %2516 = vmatprep.subr.bf16.mxu0 %v2284
    %2517 = vmatpush1.bf16.msra.mxu0 %v2283
    %2518 = vmatprep.subr.bf16.mxu0 %v2288
    %2519 = vmatpush1.bf16.msra.mxu0 %v2287
    %2520 = vmatprep.subr.bf16.mxu0 %v2292
    %2521 = vmatpush1.bf16.msra.mxu0 %v2291
    %2522 = vmatprep.subr.bf16.mxu0 %v2296
    %2523 = vmatpush1.bf16.msra.mxu0 %v2295
    %2524 = vmatprep.subr.bf16.mxu0 %v2300
    %2525 = vmatpush1.bf16.msra.mxu0 %v2299
    %2526 = vmatprep.subr.bf16.mxu0 %v2304
    %2527 = vmatpush1.bf16.msra.mxu0 %v2303
    %2528 = vmatprep.subr.bf16.mxu0 %v2308
    %2529 = vmatpush1.bf16.msra.mxu0 %v2307
    %2530 = vmatprep.subr.bf16.mxu0 %v2312
    %2531 = vmatpush1.bf16.msra.mxu0 %v2311
    %2532 = vmatprep.subr.bf16.mxu0 %v2316
    %2533 = vmatpush1.bf16.msra.mxu0 %v2315
    %2534 = vmatprep.subr.bf16.mxu0 %v2320
    %2535 = vmatpush1.bf16.msra.mxu0 %v2319
    %2536 = vmatprep.subr.bf16.mxu0 %v2324
    %2537 = vmatpush1.bf16.msra.mxu0 %v2323
    %2538 = vmatprep.subr.bf16.mxu0 %v2328
    %2539 = vmatpush1.bf16.msra.mxu0 %v2327
    %2540 = vmatprep.subr.bf16.mxu0 %v2332
    %2541 = vmatpush1.bf16.msra.mxu0 %v2331
    %2542 = vmatprep.subr.bf16.mxu0 %v2336
    %2543 = vmatpush1.bf16.msra.mxu0 %v2335
    %2544 = vmatprep.subr.bf16.mxu0 %v2340
    %2545 = vmatpush1.bf16.msra.mxu0 %v2339
    %2546 = vmatprep.mubr.bf16.mxu0 %v1680
    %2547 = vmatmul.mubr.bf16.gmra.mrb[0].mxu0 %v1679
    %v2548 = vpop.f32.mrb[0].mxu0
    %v2549 = vadd.f32 %v2506, %v2548
    %v2550 = vpop.f32.mrb[0].mxu0
    %v2551 = vadd.f32 %v2508, %v2550
    %v2552 = vpop.f32.mrb[0].mxu0
    %v2553 = vadd.f32 %v2510, %v2552
    %v2554 = vpop.f32.mrb[0].mxu0
    %v2555 = vadd.f32 %v2512, %v2554
    %2556 = vdwg.mxu0
    %2557 = vmatprep.subr.bf16.mxu0 %v2218
    %2558 = vmatpush1.bf16.msra.mxu0 %v2217
    %2559 = vmatprep.subr.bf16.mxu0 %v2222
    %2560 = vmatpush1.bf16.msra.mxu0 %v2221
    %2561 = vmatprep.subr.bf16.mxu0 %v2226
    %2562 = vmatpush1.bf16.msra.mxu0 %v2225
    %2563 = vmatprep.subr.bf16.mxu0 %v2230
    %2564 = vmatpush1.bf16.msra.mxu0 %v2229
    %2565 = vmatprep.subr.bf16.mxu0 %v2234
    %2566 = vmatpush1.bf16.msra.mxu0 %v2233
    %2567 = vmatprep.subr.bf16.mxu0 %v2238
    %2568 = vmatpush1.bf16.msra.mxu0 %v2237
    %2569 = vmatprep.subr.bf16.mxu0 %v2242
    %2570 = vmatpush1.bf16.msra.mxu0 %v2241
    %2571 = vmatprep.subr.bf16.mxu0 %v2246
    %2572 = vmatpush1.bf16.msra.mxu0 %v2245
    %2573 = vmatprep.subr.bf16.mxu0 %v2250
    %2574 = vmatpush1.bf16.msra.mxu0 %v2249
    %2575 = vmatprep.subr.bf16.mxu0 %v2254
    %2576 = vmatpush1.bf16.msra.mxu0 %v2253
    %2577 = vmatprep.subr.bf16.mxu0 %v2258
    %2578 = vmatpush1.bf16.msra.mxu0 %v2257
    %2579 = vmatprep.subr.bf16.mxu0 %v2262
    %2580 = vmatpush1.bf16.msra.mxu0 %v2261
    %2581 = vmatprep.subr.bf16.mxu0 %v2266
    %2582 = vmatpush1.bf16.msra.mxu0 %v2265
    %2583 = vmatprep.subr.bf16.mxu0 %v2270
    %2584 = vmatpush1.bf16.msra.mxu0 %v2269
    %2585 = vmatprep.subr.bf16.mxu0 %v2274
    %2586 = vmatpush1.bf16.msra.mxu0 %v2273
    %2587 = vmatprep.subr.bf16.mxu0 %v2278
    %2588 = vmatpush1.bf16.msra.mxu0 %v2277
    %2589 = vmatprep.mubr.bf16.mxu0 %v1678
    %2590 = vmatmul.mubr.bf16.gmra.mrb[0].mxu0 %v1677
    %v2591 = vpop.f32.mrb[0].mxu0
    %v2592 = vadd.f32 %v1822, %v2591
    %v2593 = vpop.f32.mrb[0].mxu0
    %v2594 = vadd.f32 %v1826, %v2593
    %v2595 = vpop.f32.mrb[0].mxu0
    %v2596 = vadd.f32 %v1822, %v2595
    %v2597 = vpop.f32.mrb[0].mxu0
    %v2598 = vadd.f32 %v1826, %v2597
    %2599 = vdwg.mxu0
    %2600 = vmatprep.subr.bf16.mxu0 %v2282
    %2601 = vmatpush1.bf16.msra.mxu0 %v2281
    %2602 = vmatprep.subr.bf16.mxu0 %v2286
    %2603 = vmatpush1.bf16.msra.mxu0 %v2285
    %2604 = vmatprep.subr.bf16.mxu0 %v2290
    %2605 = vmatpush1.bf16.msra.mxu0 %v2289
    %2606 = vmatprep.subr.bf16.mxu0 %v2294
    %2607 = vmatpush1.bf16.msra.mxu0 %v2293
    %2608 = vmatprep.subr.bf16.mxu0 %v2298
    %2609 = vmatpush1.bf16.msra.mxu0 %v2297
    %2610 = vmatprep.subr.bf16.mxu0 %v2302
    %2611 = vmatpush1.bf16.msra.mxu0 %v2301
    %2612 = vmatprep.subr.bf16.mxu0 %v2306
    %2613 = vmatpush1.bf16.msra.mxu0 %v2305
    %2614 = vmatprep.subr.bf16.mxu0 %v2310
    %2615 = vmatpush1.bf16.msra.mxu0 %v2309
    %2616 = vmatprep.subr.bf16.mxu0 %v2314
    %2617 = vmatpush1.bf16.msra.mxu0 %v2313
    %2618 = vmatprep.subr.bf16.mxu0 %v2318
    %2619 = vmatpush1.bf16.msra.mxu0 %v2317
    %2620 = vmatprep.subr.bf16.mxu0 %v2322
    %2621 = vmatpush1.bf16.msra.mxu0 %v2321
    %2622 = vmatprep.subr.bf16.mxu0 %v2326
    %2623 = vmatpush1.bf16.msra.mxu0 %v2325
    %2624 = vmatprep.subr.bf16.mxu0 %v2330
    %2625 = vmatpush1.bf16.msra.mxu0 %v2329
    %2626 = vmatprep.subr.bf16.mxu0 %v2334
    %2627 = vmatpush1.bf16.msra.mxu0 %v2333
    %2628 = vmatprep.subr.bf16.mxu0 %v2338
    %2629 = vmatpush1.bf16.msra.mxu0 %v2337
    %2630 = vmatprep.subr.bf16.mxu0 %v2342
    %2631 = vmatpush1.bf16.msra.mxu0 %v2341
    %2632 = vmatprep.mubr.bf16.mxu0 %v1680
    %2633 = vmatmul.mubr.bf16.gmra.mrb[0].mxu0 %v1679
    %v2634 = vpop.f32.mrb[0].mxu0
    %v2635 = vadd.f32 %v2592, %v2634
    %v2636 = vpop.f32.mrb[0].mxu0
    %v2637 = vadd.f32 %v2594, %v2636
    %v2638 = vpop.f32.mrb[0].mxu0
    %v2639 = vadd.f32 %v2596, %v2638
    %v2640 = vpop.f32.mrb[0].mxu0
    %v2641 = vadd.f32 %v2598, %v2640
    %2642 = vdwg.mxu0
    %v2643 = vmax.f32 %v2549, 0.0
    %v2644 = vmax.f32 %v2551, 0.0
    %v2645 = vmax.f32 %v2635, 0.0
    %v2646 = vmax.f32 %v2637, 0.0
    %v2647 = vmax.f32 %v2553, 0.0
    %v2648 = vmax.f32 %v2555, 0.0
    %v2649 = vmax.f32 %v2639, 0.0
    %v2650 = vmax.f32 %v2641, 0.0
    %v2651 = vpack.c.bf16 %v2647, %v2643
    %v2652 = vpack.c.bf16 %v2648, %v2644
    %v2653 = vpack.c.bf16 %v2649, %v2645
    %v2654 = vpack.c.bf16 %v2650, %v2646
    %v2655 = vld [vmem:[#allocation8] sm:$0xf]
    %v2656 = vld [vmem:[#allocation8 + $0x4] sm:$0xf]
    %v2657 = vld [vmem:[#allocation8 + $0x8] sm:$0xf]
    %v2658 = vld [vmem:[#allocation8 + $0xc] sm:$0xf]
    %v2659 = vld [vmem:[#allocation8 + $0x10] sm:$0xf]
    %v2660 = vld [vmem:[#allocation8 + $0x14] sm:$0xf]
    %v2661 = vld [vmem:[#allocation8 + $0x18] sm:$0xf]
    %v2662 = vld [vmem:[#allocation8 + $0x1c] sm:$0xf]
    %v2663 = vld [vmem:[#allocation8 + $0x20] sm:$0xf]
    %v2664 = vld [vmem:[#allocation8 + $0x24] sm:$0xf]
    %v2665 = vld [vmem:[#allocation8 + $0x28] sm:$0xf]
    %v2666 = vld [vmem:[#allocation8 + $0x2c] sm:$0xf]
    %v2667 = vld [vmem:[#allocation8 + $0x30] sm:$0xf]
    %v2668 = vld [vmem:[#allocation8 + $0x34] sm:$0xf]
    %v2669 = vld [vmem:[#allocation8 + $0x38] sm:$0xf]
    %v2670 = vld [vmem:[#allocation8 + $0x3c] sm:$0xf]
    %v2671 = vld [vmem:[#allocation8 + $0x40] sm:$0xf]
    %v2672 = vld [vmem:[#allocation8 + $0x44] sm:$0xf]
    %v2673 = vld [vmem:[#allocation8 + $0x48] sm:$0xf]
    %v2674 = vld [vmem:[#allocation8 + $0x4c] sm:$0xf]
    %v2675 = vld [vmem:[#allocation8 + $0x50] sm:$0xf]
    %v2676 = vld [vmem:[#allocation8 + $0x54] sm:$0xf]
    %v2677 = vld [vmem:[#allocation8 + $0x58] sm:$0xf]
    %v2678 = vld [vmem:[#allocation8 + $0x5c] sm:$0xf]
    %v2679 = vld [vmem:[#allocation8 + $0x60] sm:$0xf]
    %v2680 = vld [vmem:[#allocation8 + $0x64] sm:$0xf]
    %v2681 = vld [vmem:[#allocation8 + $0x68] sm:$0xf]
    %v2682 = vld [vmem:[#allocation8 + $0x6c] sm:$0xf]
    %v2683 = vld [vmem:[#allocation8 + $0x70] sm:$0xf]
    %v2684 = vld [vmem:[#allocation8 + $0x74] sm:$0xf]
    %v2685 = vld [vmem:[#allocation8 + $0x78] sm:$0xf]
    %v2686 = vld [vmem:[#allocation8 + $0x7c] sm:$0xf]
    %v2687 = vld [vmem:[#allocation8 + $0x80] sm:$0xf]
    %v2688 = vld [vmem:[#allocation8 + $0x84] sm:$0xf]
    %v2689 = vld [vmem:[#allocation8 + $0x88] sm:$0xf]
    %v2690 = vld [vmem:[#allocation8 + $0x8c] sm:$0xf]
    %v2691 = vld [vmem:[#allocation8 + $0x90] sm:$0xf]
    %v2692 = vld [vmem:[#allocation8 + $0x94] sm:$0xf]
    %v2693 = vld [vmem:[#allocation8 + $0x98] sm:$0xf]
    %v2694 = vld [vmem:[#allocation8 + $0x9c] sm:$0xf]
    %v2695 = vld [vmem:[#allocation8 + $0xa0] sm:$0xf]
    %v2696 = vld [vmem:[#allocation8 + $0xa4] sm:$0xf]
    %v2697 = vld [vmem:[#allocation8 + $0xa8] sm:$0xf]
    %v2698 = vld [vmem:[#allocation8 + $0xac] sm:$0xf]
    %v2699 = vld [vmem:[#allocation8 + $0xb0] sm:$0xf]
    %v2700 = vld [vmem:[#allocation8 + $0xb4] sm:$0xf]
    %v2701 = vld [vmem:[#allocation8 + $0xb8] sm:$0xf]
    %v2702 = vld [vmem:[#allocation8 + $0xbc] sm:$0xf]
    %v2703 = vld [vmem:[#allocation8 + $0xc0] sm:$0xf]
    %v2704 = vld [vmem:[#allocation8 + $0xc4] sm:$0xf]
    %v2705 = vld [vmem:[#allocation8 + $0xc8] sm:$0xf]
    %v2706 = vld [vmem:[#allocation8 + $0xcc] sm:$0xf]
    %v2707 = vld [vmem:[#allocation8 + $0xd0] sm:$0xf]
    %v2708 = vld [vmem:[#allocation8 + $0xd4] sm:$0xf]
    %v2709 = vld [vmem:[#allocation8 + $0xd8] sm:$0xf]
    %v2710 = vld [vmem:[#allocation8 + $0xdc] sm:$0xf]
    %v2711 = vld [vmem:[#allocation8 + $0xe0] sm:$0xf]
    %v2712 = vld [vmem:[#allocation8 + $0xe4] sm:$0xf]
    %v2713 = vld [vmem:[#allocation8 + $0xe8] sm:$0xf]
    %v2714 = vld [vmem:[#allocation8 + $0xec] sm:$0xf]
    %v2715 = vld [vmem:[#allocation8 + $0xf0] sm:$0xf]
    %v2716 = vld [vmem:[#allocation8 + $0xf4] sm:$0xf]
    %v2717 = vld [vmem:[#allocation8 + $0xf8] sm:$0xf]
    %v2718 = vld [vmem:[#allocation8 + $0xfc] sm:$0xf]
    %v2719 = vld [vmem:[%s6] sm:$0x1]
    %v2721 = vlaneseq
    %v2722 = vshrl.u32 %v2721, 7
    %v2723 = vsub.s32 0, %v2722
    %v2724 = vrot.slane %v2719, %v2723
    %v2790 = vunpack.c.l.b16 %v2655
    %v2791 = vunpack.c.l.b16 %v2656
    %v2792 = vunpack.c.l.b16 %v2657
    %v2793 = vunpack.c.l.b16 %v2658
    %v2794 = vunpack.c.l.b16 %v2659
    %v2795 = vunpack.c.l.b16 %v2660
    %v2796 = vunpack.c.l.b16 %v2661
    %v2797 = vunpack.c.l.b16 %v2662
    %v2798 = vunpack.c.l.b16 %v2663
    %v2799 = vunpack.c.l.b16 %v2664
    %v2800 = vunpack.c.l.b16 %v2665
    %v2801 = vunpack.c.l.b16 %v2666
    %v2802 = vunpack.c.l.b16 %v2667
    %v2803 = vunpack.c.l.b16 %v2668
    %v2804 = vunpack.c.l.b16 %v2669
    %v2805 = vunpack.c.l.b16 %v2670
    %v2806 = vunpack.c.l.b16 %v2671
    %v2807 = vunpack.c.l.b16 %v2672
    %v2808 = vunpack.c.l.b16 %v2673
    %v2809 = vunpack.c.l.b16 %v2674
    %v2810 = vunpack.c.l.b16 %v2675
    %v2811 = vunpack.c.l.b16 %v2676
    %v2812 = vunpack.c.l.b16 %v2677
    %v2813 = vunpack.c.l.b16 %v2678
    %v2814 = vunpack.c.l.b16 %v2679
    %v2815 = vunpack.c.l.b16 %v2680
    %v2816 = vunpack.c.l.b16 %v2681
    %v2817 = vunpack.c.l.b16 %v2682
    %v2818 = vunpack.c.l.b16 %v2683
    %v2819 = vunpack.c.l.b16 %v2684
    %v2820 = vunpack.c.l.b16 %v2685
    %v2821 = vunpack.c.l.b16 %v2686
    %v2822 = vunpack.c.l.b16 %v2687
    %v2823 = vunpack.c.l.b16 %v2688
    %v2824 = vunpack.c.l.b16 %v2689
    %v2825 = vunpack.c.l.b16 %v2690
    %v2826 = vunpack.c.l.b16 %v2691
    %v2827 = vunpack.c.l.b16 %v2692
    %v2828 = vunpack.c.l.b16 %v2693
    %v2829 = vunpack.c.l.b16 %v2694
    %v2830 = vunpack.c.l.b16 %v2695
    %v2831 = vunpack.c.l.b16 %v2696
    %v2832 = vunpack.c.l.b16 %v2697
    %v2833 = vunpack.c.l.b16 %v2698
    %v2834 = vunpack.c.l.b16 %v2699
    %v2835 = vunpack.c.l.b16 %v2700
    %v2836 = vunpack.c.l.b16 %v2701
    %v2837 = vunpack.c.l.b16 %v2702
    %v2838 = vunpack.c.l.b16 %v2703
    %v2839 = vunpack.c.l.b16 %v2704
    %v2840 = vunpack.c.l.b16 %v2705
    %v2841 = vunpack.c.l.b16 %v2706
    %v2842 = vunpack.c.l.b16 %v2707
    %v2843 = vunpack.c.l.b16 %v2708
    %v2844 = vunpack.c.l.b16 %v2709
    %v2845 = vunpack.c.l.b16 %v2710
    %v2846 = vunpack.c.l.b16 %v2711
    %v2847 = vunpack.c.l.b16 %v2712
    %v2848 = vunpack.c.l.b16 %v2713
    %v2849 = vunpack.c.l.b16 %v2714
    %v2850 = vunpack.c.l.b16 %v2715
    %v2851 = vunpack.c.l.b16 %v2716
    %v2852 = vunpack.c.l.b16 %v2717
    %v2853 = vunpack.c.l.b16 %v2718
    %v2854 = vpack.c.b16 %v2791, %v2790
    %v2855 = vpack.c.b16 %v2793, %v2792
    %v2856 = vpack.c.b16 %v2795, %v2794
    %v2857 = vpack.c.b16 %v2797, %v2796
    %v2858 = vpack.c.b16 %v2799, %v2798
    %v2859 = vpack.c.b16 %v2801, %v2800
    %v2860 = vpack.c.b16 %v2803, %v2802
    %v2861 = vpack.c.b16 %v2805, %v2804
    %v2862 = vpack.c.b16 %v2807, %v2806
    %v2863 = vpack.c.b16 %v2809, %v2808
    %v2864 = vpack.c.b16 %v2811, %v2810
    %v2865 = vpack.c.b16 %v2813, %v2812
    %v2866 = vpack.c.b16 %v2815, %v2814
    %v2867 = vpack.c.b16 %v2817, %v2816
    %v2868 = vpack.c.b16 %v2819, %v2818
    %v2869 = vpack.c.b16 %v2821, %v2820
    %v2870 = vpack.c.b16 %v2823, %v2822
    %v2871 = vpack.c.b16 %v2825, %v2824
    %v2872 = vpack.c.b16 %v2827, %v2826
    %v2873 = vpack.c.b16 %v2829, %v2828
    %v2874 = vpack.c.b16 %v2831, %v2830
    %v2875 = vpack.c.b16 %v2833, %v2832
    %v2876 = vpack.c.b16 %v2835, %v2834
    %v2877 = vpack.c.b16 %v2837, %v2836
    %v2878 = vpack.c.b16 %v2839, %v2838
    %v2879 = vpack.c.b16 %v2841, %v2840
    %v2880 = vpack.c.b16 %v2843, %v2842
    %v2881 = vpack.c.b16 %v2845, %v2844
    %v2882 = vpack.c.b16 %v2847, %v2846
    %v2883 = vpack.c.b16 %v2849, %v2848
    %v2884 = vpack.c.b16 %v2851, %v2850
    %v2885 = vpack.c.b16 %v2853, %v2852
    %2918 = vmatprep.subr.bf16.mxu0 0
    %2919 = vmatpush1.bf16.msra.mxu0 %v2854
    %2920 = vmatprep.subr.bf16.mxu0 0
    %2921 = vmatpush1.bf16.msra.mxu0 %v2855
    %2922 = vmatprep.subr.bf16.mxu0 0
    %2923 = vmatpush1.bf16.msra.mxu0 %v2856
    %2924 = vmatprep.subr.bf16.mxu0 0
    %2925 = vmatpush1.bf16.msra.mxu0 %v2857
    %2926 = vmatprep.subr.bf16.mxu0 0
    %2927 = vmatpush1.bf16.msra.mxu0 %v2858
    %2928 = vmatprep.subr.bf16.mxu0 0
    %2929 = vmatpush1.bf16.msra.mxu0 %v2859
    %2930 = vmatprep.subr.bf16.mxu0 0
    %2931 = vmatpush1.bf16.msra.mxu0 %v2860
    %2932 = vmatprep.subr.bf16.mxu0 0
    %2933 = vmatpush1.bf16.msra.mxu0 %v2861
    %2934 = vmatprep.subr.bf16.mxu0 0
    %2935 = vmatpush1.bf16.msra.mxu0 %v2862
    %2936 = vmatprep.subr.bf16.mxu0 0
    %2937 = vmatpush1.bf16.msra.mxu0 %v2863
    %2938 = vmatprep.subr.bf16.mxu0 0
    %2939 = vmatpush1.bf16.msra.mxu0 %v2864
    %2940 = vmatprep.subr.bf16.mxu0 0
    %2941 = vmatpush1.bf16.msra.mxu0 %v2865
    %2942 = vmatprep.subr.bf16.mxu0 0
    %2943 = vmatpush1.bf16.msra.mxu0 %v2866
    %2944 = vmatprep.subr.bf16.mxu0 0
    %2945 = vmatpush1.bf16.msra.mxu0 %v2867
    %2946 = vmatprep.subr.bf16.mxu0 0
    %2947 = vmatpush1.bf16.msra.mxu0 %v2868
    %2948 = vmatprep.subr.bf16.mxu0 0
    %2949 = vmatpush1.bf16.msra.mxu0 %v2869
    %2950 = vmatprep.mubr.bf16.mxu0 %v2652
    %2951 = vmatmul.mubr.bf16.gmra.mrb[0].mxu0 %v2651
    %v2952 = vpop.f32.mrb[0].mxu0
    %v2953 = vadd.f32 %v2724, %v2952
    %v2954 = vpop.f32.mrb[0].mxu0
    %v2955 = vpop.f32.mrb[0].mxu0
    %v2956 = vadd.f32 %v2724, %v2955
    %v2957 = vpop.f32.mrb[0].mxu0
    %2958 = vdwg.mxu0
    %2959 = vmatprep.subr.bf16.mxu0 0
    %2960 = vmatpush1.bf16.msra.mxu0 %v2870
    %2961 = vmatprep.subr.bf16.mxu0 0
    %2962 = vmatpush1.bf16.msra.mxu0 %v2871
    %2963 = vmatprep.subr.bf16.mxu0 0
    %2964 = vmatpush1.bf16.msra.mxu0 %v2872
    %2965 = vmatprep.subr.bf16.mxu0 0
    %2966 = vmatpush1.bf16.msra.mxu0 %v2873
    %2967 = vmatprep.subr.bf16.mxu0 0
    %2968 = vmatpush1.bf16.msra.mxu0 %v2874
    %2969 = vmatprep.subr.bf16.mxu0 0
    %2970 = vmatpush1.bf16.msra.mxu0 %v2875
    %2971 = vmatprep.subr.bf16.mxu0 0
    %2972 = vmatpush1.bf16.msra.mxu0 %v2876
    %2973 = vmatprep.subr.bf16.mxu0 0
    %2974 = vmatpush1.bf16.msra.mxu0 %v2877
    %2975 = vmatprep.subr.bf16.mxu0 0
    %2976 = vmatpush1.bf16.msra.mxu0 %v2878
    %2977 = vmatprep.subr.bf16.mxu0 0
    %2978 = vmatpush1.bf16.msra.mxu0 %v2879
    %2979 = vmatprep.subr.bf16.mxu0 0
    %2980 = vmatpush1.bf16.msra.mxu0 %v2880
    %2981 = vmatprep.subr.bf16.mxu0 0
    %2982 = vmatpush1.bf16.msra.mxu0 %v2881
    %2983 = vmatprep.subr.bf16.mxu0 0
    %2984 = vmatpush1.bf16.msra.mxu0 %v2882
    %2985 = vmatprep.subr.bf16.mxu0 0
    %2986 = vmatpush1.bf16.msra.mxu0 %v2883
    %2987 = vmatprep.subr.bf16.mxu0 0
    %2988 = vmatpush1.bf16.msra.mxu0 %v2884
    %2989 = vmatprep.subr.bf16.mxu0 0
    %2990 = vmatpush1.bf16.msra.mxu0 %v2885
    %2991 = vmatprep.mubr.bf16.mxu0 %v2654
    %2992 = vmatmul.mubr.bf16.gmra.mrb[0].mxu0 %v2653
    %v2993 = vpop.f32.mrb[0].mxu0
    %v2994 = vadd.f32 %v2953, %v2993
    %v2995 = vpop.f32.mrb[0].mxu0
    %v2996 = vpop.f32.mrb[0].mxu0
    %v2997 = vadd.f32 %v2956, %v2996
    %v2998 = vpop.f32.mrb[0].mxu0
    %2999 = vdwg.mxu0
    %v3000 = vmax.f32 %v2994, 0.0
    %v3001 = vmax.f32 %v2997, 0.0
    %v3002 = vmul.f32 %v3000, %v3000
    %v3003 = vmul.f32 %v3001, %v3001
    %3004 = vadd.xlane.f32.xlu0 %v3002
    %v3005 = vpop.xlane.xlu0 %3004
    %3006 = vadd.xlane.f32.xlu0 %v3003
    %v3007 = vpop.xlane.xlu0 %3006
    %v3008 = vmax.f32 %v3005, 1e-24
    %v3009 = vmax.f32 %v3007, 1e-24
    %v3010 = vrsqrt.pop %v3008
    %v3011 = vrsqrt.pop %v3009
    %v3012 = vmul.f32 %v3000, %v3010
    %v3013 = vmul.f32 %v3001, %v3011
    %v3014 = vpack.c.bf16 %v3013, %v3012
    %v3015 = vld [vmem:[#allocation10] sm:$0xf]
    %v3016 = vld [vmem:[#allocation10 + $0x4] sm:$0xf]
    %v3017 = vld [vmem:[#allocation10 + $0x8] sm:$0xf]
    %v3018 = vld [vmem:[#allocation10 + $0xc] sm:$0xf]
    %v3019 = vld [vmem:[#allocation10 + $0x10] sm:$0xf]
    %v3020 = vld [vmem:[#allocation10 + $0x14] sm:$0xf]
    %v3021 = vld [vmem:[#allocation10 + $0x18] sm:$0xf]
    %v3022 = vld [vmem:[#allocation10 + $0x1c] sm:$0xf]
    %v3023 = vld [vmem:[#allocation10 + $0x20] sm:$0xf]
    %v3024 = vld [vmem:[#allocation10 + $0x24] sm:$0xf]
    %v3025 = vld [vmem:[#allocation10 + $0x28] sm:$0xf]
    %v3026 = vld [vmem:[#allocation10 + $0x2c] sm:$0xf]
    %v3027 = vld [vmem:[#allocation10 + $0x30] sm:$0xf]
    %v3028 = vld [vmem:[#allocation10 + $0x34] sm:$0xf]
    %v3029 = vld [vmem:[#allocation10 + $0x38] sm:$0xf]
    %v3030 = vld [vmem:[#allocation10 + $0x3c] sm:$0xf]
    %v3047 = vunpack.c.l.b16 %v3015
    %v3048 = vunpack.c.l.b16 %v3016
    %v3049 = vunpack.c.l.b16 %v3017
    %v3050 = vunpack.c.l.b16 %v3018
    %v3051 = vunpack.c.l.b16 %v3019
    %v3052 = vunpack.c.l.b16 %v3020
    %v3053 = vunpack.c.l.b16 %v3021
    %v3054 = vunpack.c.l.b16 %v3022
    %v3055 = vunpack.c.l.b16 %v3023
    %v3056 = vunpack.c.l.b16 %v3024
    %v3057 = vunpack.c.l.b16 %v3025
    %v3058 = vunpack.c.l.b16 %v3026
    %v3059 = vunpack.c.l.b16 %v3027
    %v3060 = vunpack.c.l.b16 %v3028
    %v3061 = vunpack.c.l.b16 %v3029
    %v3062 = vunpack.c.l.b16 %v3030
    %v3063 = vpack.c.b16 %v3048, %v3047
    %v3064 = vpack.c.b16 %v3050, %v3049
    %v3065 = vpack.c.b16 %v3052, %v3051
    %v3066 = vpack.c.b16 %v3054, %v3053
    %v3067 = vpack.c.b16 %v3056, %v3055
    %v3068 = vpack.c.b16 %v3058, %v3057
    %v3069 = vpack.c.b16 %v3060, %v3059
    %v3070 = vpack.c.b16 %v3062, %v3061
    %3079 = vmatprep.subr.bf16.mxu0 0
    %3080 = vmatpush1.bf16.msra.mxu0 %v3063
    %3081 = vmatprep.subr.bf16.mxu0 0
    %3082 = vmatpush1.bf16.msra.mxu0 %v3064
    %3083 = vmatprep.subr.bf16.mxu0 0
    %3084 = vmatpush1.bf16.msra.mxu0 %v3065
    %3085 = vmatprep.subr.bf16.mxu0 0
    %3086 = vmatpush1.bf16.msra.mxu0 %v3066
    %3087 = vmatprep.subr.bf16.mxu0 0
    %3088 = vmatpush1.bf16.msra.mxu0 %v3067
    %3089 = vmatprep.subr.bf16.mxu0 0
    %3090 = vmatpush1.bf16.msra.mxu0 %v3068
    %3091 = vmatprep.subr.bf16.mxu0 0
    %3092 = vmatpush1.bf16.msra.mxu0 %v3069
    %3093 = vmatprep.subr.bf16.mxu0 0
    %3094 = vmatpush1.bf16.msra.mxu0 %v3070
    %3095 = vmatprep.subr.bf16.mxu0 0
    %3096 = vmatpush1.bf16.msra.mxu0 0
    %3097 = vmatprep.subr.bf16.mxu0 0
    %3098 = vmatpush1.bf16.msra.mxu0 0
    %3099 = vmatprep.subr.bf16.mxu0 0
    %3100 = vmatpush1.bf16.msra.mxu0 0
    %3101 = vmatprep.subr.bf16.mxu0 0
    %3102 = vmatpush1.bf16.msra.mxu0 0
    %3103 = vmatprep.subr.bf16.mxu0 0
    %3104 = vmatpush1.bf16.msra.mxu0 0
    %3105 = vmatprep.subr.bf16.mxu0 0
    %3106 = vmatpush1.bf16.msra.mxu0 0
    %3107 = vmatprep.subr.bf16.mxu0 0
    %3108 = vmatpush1.bf16.msra.mxu0 0
    %3109 = vmatprep.subr.bf16.mxu0 0
    %3110 = vmatpush1.bf16.msra.mxu0 0
    %3111 = vmatprep.mubr.bf16.mxu0 0
    %3112 = vmatmul.mubr.bf16.gmra.mrb[0].mxu0 %v3014
    %v3113 = vpop.f32.mrb[0].mxu0
    %v3114 = vadd.f32 0.0, %v3113
    %v3115 = vpop.f32.mrb[0].mxu0
    %v3116 = vpop.f32.mrb[0].mxu0
    %v3117 = vadd.f32 0.0, %v3116
    %v3118 = vpop.f32.mrb[0].mxu0
    %3119 = vdwg.mxu0
    %3120 = vst [vmem:[#allocation12] sm:$0xff] %v2994
    %3121 = vst [vmem:[#allocation12 + $0x8] sm:$0xff] %v2997
    %v3122 = vpack.c.bf16 %v3117, %v3114
    %v3124 = vunpack.c.l.b16 %v3122
    %v3125 = vunpack.c.h.b16 %v3122
    %v3126 = vpack.c.b16 %v3124, %v3124
    %v3127 = vpack.c.b16 %v3125, %v3125
    %3130 = vst [vmem:[#allocation11] sm:$0xf] %v3126
    %3131 = vst [vmem:[#allocation11 + $0x4] sm:$0xf] %v3127
    // Predicated region
    $region54: #{tpu_custom_call.1} parent=1 // pred_check
      _
    $region55: #{tpu_custom_call.1} parent=1 // pred_check_branch
      %3133 = sbr.rel (0) target = $region57
    $region56: #{tpu_custom_call.1} parent=1 // pred_region
      %s3135 = ssub.s32 128, 128
      %3136 = vsyncadd [#allocation4], %s3135
      %s3137 = sshll.u32 [#allocation11], 4
      %s3138 = int_to_ptr.vmem [resolvable:$true] %s3137
      %3143 = dma.vmem_to_hbm [thread:$0]  %s3138, 128, %s8, [#allocation4], 64, 64, 4
    $region57: #{tpu_custom_call.1} parent=1 // pred_fallthru
      _
    // Predicated region
    $region58: #{tpu_custom_call.1} parent=1 // pred_check
      _
    $region59: #{tpu_custom_call.1} parent=1 // pred_check_branch
      %3145 = sbr.rel (0) target = $region61
    $region60: #{tpu_custom_call.1} parent=1 // pred_region
      %s3147 = ssub.s32 256, 256
      %3148 = vsyncadd [#allocation13], %s3147
      %s3149 = sshll.u32 [#allocation12], 4
      %s3150 = int_to_ptr.vmem [resolvable:$true] %s3149
      %3155 = dma.vmem_to_hbm [thread:$0]  %s3150, 256, %s9, [#allocation13], 128, 128, 8
    $region61: #{tpu_custom_call.1} parent=1 // pred_fallthru
      _
    // Predicated region
    $region62: #{tpu_custom_call.1} parent=1 // pred_check
      _
    $region63: #{tpu_custom_call.1} parent=1 // pred_check_branch
      %3157 = sbr.rel (0) target = $region65
    $region64: #{tpu_custom_call.1} parent=1 // pred_region
      %3158 = dma.done [#allocation4], 128
    $region65: #{tpu_custom_call.1} parent=1 // pred_fallthru
      _
    // Predicated region
    $region66: #{tpu_custom_call.1} parent=1 // pred_check
      _
    $region67: #{tpu_custom_call.1} parent=1 // pred_check_branch
      %3160 = sbr.rel (0) target = $region69
    $region68: #{tpu_custom_call.1} parent=1 // pred_region
      %3161 = dma.done [#allocation13], 256
    $region69: #{tpu_custom_call.1} parent=1 // pred_fallthru
      _
    %3162 = vsyncpa [#allocation3], 1
    %3163 = vsyncpa [#allocation6], 1
    %3164 = vsyncpa [#allocation9], 1
    %3165 = vsyncpa [#allocation4], 1
    %3166 = vsyncpa [#allocation13], 1

</llo_original>
